<compile_context>
chip_gen: v7x
topology: tpu7x:2x2x1
jax: 0.10.0
libtpu: 0.0.40
codegen_flags: <defaults>
</compile_context>

<pallas_src>
from functools import partial

import numpy as np
import jax
import jax.numpy as jnp
from jax.experimental import pallas as pl
from jax.experimental.pallas import tpu as pltpu


def _round_up(v, m):
    return ((v + m - 1) // m) * m


def _if_kernel(frames_ref, basis_ref, out_ref, *, precision):
    # frames_ref : (TM, N)        raw (un-windowed) signal frames
    # basis_ref  : (N, 3*F_blk)   [window*cos | window*sin | d_window*sin] for this F block
    # out_ref    : (TM, F_blk)    instantaneous-frequency bin offsets
    fb = out_ref.shape[-1]

    # One wide MXU pass shared by the three spectra of this frequency block.
    prod = jnp.dot(frames_ref[...], basis_ref[...],
                   precision=precision,
                   preferred_element_type=jnp.float32)        # (TM, 3*F_blk) f32

    re = prod[:, 0 * fb:1 * fb]            # Re(stft)        =  (x*w)  @ cos
    im = -prod[:, 1 * fb:2 * fb]           # Im(stft)        = -(x*w)  @ sin
    diff_im_neg = prod[:, 2 * fb:3 * fb]   # -Im(diff_stft)  =  (x*dw) @ sin

    # Epilogue stays f32.  arctan2 is the VALU bottleneck at small n_fft; only
    # the last (partial) frequency block carries padded lanes, so there is no
    # fully-padded block to gate with pl.when.
    mag = jnp.sqrt(re * re + im * im)
    phase = jnp.arctan2(im, re + 1e-15)
    inv = pl.reciprocal(mag + 0.001, approx=True)             # EUP slot, VALU stays free
    out_ref[...] = -phase * diff_im_neg * inv


def instantaneous_frequency(x, size, *, tm=512, f_blk=512,
                            compute_dtype=jnp.bfloat16):
    """x: [B, W] float32 signal. Returns [B, size//2+1, 1 + W//(size//4)] float32.

    compute_dtype: dtype of the MXU operands (frames & folded DFT basis).
    bfloat16 (default) runs the MXU at full rate and halves streamed / resident
    bytes; accumulation and the epilogue stay float32.  Pass jnp.float32 when
    sub-percent per-bin accuracy is required (the matmul then uses
    precision=HIGHEST).
    """
    assert x.ndim == 2
    assert size % 4 == 0
    B, W = x.shape
    hop = size // 4
    F = size // 2 + 1

    # Frequency-axis tiling: bounds the resident basis block (large n_fft fits
    # v7x's 64 MiB VMEM) and the size of the epilogue temporaries.
    F_blk = min(f_blk, _round_up(F, 128))          # multiple of 128 (lane width)
    F_pad = _round_up(F, F_blk)
    n_j = F_pad // F_blk

    # ---- deterministic module parameters, windows folded into the DFT bases ----
    n = np.arange(size)
    window = 0.5 - 0.5 * np.cos(2.0 * np.pi * n / size)          # hann_window (periodic)
    freq_angular = np.linspace(0.0, 2.0 * np.pi, size, endpoint=False)
    d_window = np.sin(-freq_angular) * np.pi / size
    k = np.arange(F)
    ang = 2.0 * np.pi * np.outer(n, k) / size                    # (N, F)
    cos_b = np.cos(ang)
    sin_b = np.sin(ang)

    basis = np.zeros((size, 3, F_pad), dtype=np.float32)
    basis[:, 0, :F] = window[:, None] * cos_b
    basis[:, 1, :F] = window[:, None] * sin_b
    basis[:, 2, :F] = d_window[:, None] * sin_b
    # Group the three spectra per frequency block: (N, n_j, 3, F_blk) flattened
    # so column-block j of the flat basis holds [w*cos_j | w*sin_j | dw*sin_j].
    basis = basis.reshape(size, 3, n_j, F_blk).transpose(0, 2, 1, 3)
    basis = basis.reshape(size, n_j * 3 * F_blk)
    basis = jnp.asarray(basis, dtype=compute_dtype)

    # ---- framing (torch.stft center=True reflect pad), slices + concat ----
    xp = jnp.pad(x.astype(jnp.float32), ((0, 0), (size // 2, size // 2)),
                 mode="reflect")
    T = 1 + W // hop
    Lp = _round_up(W + size, hop)
    xp = jnp.pad(xp, ((0, 0), (0, Lp - (W + size))))
    xcols = xp.reshape(B, Lp // hop, hop)
    # frame t = concat of 4 consecutive hop-sized chunks starting at row t.
    # TODO(synk): the 4x-overlapped frame materialization streams ~4x the signal
    # through HBM; for long signals replace with memory_space=pl.ANY on the
    # padded signal plus a manual make_async_copy of the overlapping
    # (TM-1)*hop+size window per row tile.
    frames = jnp.concatenate([xcols[:, j:j + T, :] for j in range(4)], axis=2)  # [B,T,size]
    M = B * T
    frames = frames.reshape(M, size)

    # Row tile: large (amortize per-step overhead) but keep >= 2 row tiles when
    # possible so megacore (v7x, 2 TCs) can split the parallel axis.
    TM = min(tm, max(8, _round_up((M + 1) // 2, 8)))
    M_pad = _round_up(M, TM)
    if M_pad != M:
        frames = jnp.pad(frames, ((0, M_pad - M), (0, 0)))
    frames = frames.astype(compute_dtype)

    # VMEM budget: double-buffered frames / basis-block / out tiles, the
    # (TM, 3*F_blk) matmul result, ~6 (TM, F_blk) f32 epilogue temporaries,
    # plus headroom; clamped to a ceiling that is safe on v5e/v6e/v7x.
    dsize = jnp.dtype(compute_dtype).itemsize
    est = (2 * TM * size * dsize            # frames tile (double buffered)
           + 2 * size * 3 * F_blk * dsize   # basis block (double buffered)
           + 2 * TM * F_blk * 4             # out tile (double buffered)
           + TM * 3 * F_blk * 4             # matmul result
           + 6 * TM * F_blk * 4             # re/im/diff/mag/phase/inv temps
           + (2 << 20))                     # headroom
    vmem_limit = int(min(max(est, 16 << 20), 64 << 20))

    precision = (jax.lax.Precision.HIGHEST
                 if jnp.dtype(compute_dtype) == jnp.dtype(jnp.float32) else None)

    out = pl.pallas_call(
        partial(_if_kernel, precision=precision),
        out_shape=jax.ShapeDtypeStruct((M_pad, F_pad), jnp.float32),
        grid_spec=pltpu.PrefetchScalarGridSpec(
            num_scalar_prefetch=0,
            grid=(M_pad // TM, n_j),
            in_specs=[
                # frames tile: index constant over j -> reused, not re-fetched
                pl.BlockSpec((TM, size), lambda i, j: (i, 0)),
                # basis block for frequency block j
                pl.BlockSpec((size, 3 * F_blk), lambda i, j: (0, j)),
            ],
            out_specs=pl.BlockSpec((TM, F_blk), lambda i, j: (i, j)),
        ),
        compiler_params=pltpu.CompilerParams(
            dimension_semantics=("parallel", "arbitrary"),
            vmem_limit_bytes=vmem_limit,
        ),
    )(frames, basis)

    out = out[:M, :F].reshape(B, T, F)        # [B, T, F]
    # TODO(synk): folding this transpose into the kernel (transposed out blocks)
    # forces TM to lane multiples (hurts small-M padding) and still leaves a
    # (F,B,T)->(B,F,T) permute in the wrapper, so it is kept host-side for now.
    return jnp.transpose(out, (0, 2, 1))      # [B, F, T]  (torch.stft layout)


def _reference(x, size):
    """Pure-JAX float32 reference (gather framing, exact division).

    Returns (bin_offset, period) where period = 2*pi*(-Im diff_stft)/(mag+1e-3)
    is the amount bin_offset changes under a +/-2*pi phase wrap.  Bins whose
    exact Im(stft) is 0 (e.g. the symmetric, reflect-padded first frame) have
    phase = +/-pi up to fp noise, so either sign is a valid answer; the test
    compares modulo this period.
    """
    B, W = x.shape
    hop = size // 4
    F = size // 2 + 1
    n = np.arange(size)
    window = (0.5 - 0.5 * np.cos(2.0 * np.pi * n / size)).astype(np.float32)
    freq_angular = np.linspace(0.0, 2.0 * np.pi, size, endpoint=False)
    d_window = (np.sin(-freq_angular) * np.pi / size).astype(np.float32)
    k = np.arange(F)
    ang = 2.0 * np.pi * np.outer(n, k) / size
    cos_b, sin_b = np.cos(ang).astype(np.float32), np.sin(ang).astype(np.float32)

    xp = jnp.pad(x, ((0, 0), (size // 2, size // 2)), mode="reflect")
    T = 1 + W // hop
    idx = np.arange(T)[:, None] * hop + np.arange(size)[None, :]
    fr = xp[:, idx]                                           # [B, T, N]
    xw = fr * window
    xd = fr * d_window
    hi = jax.lax.Precision.HIGHEST
    re = jnp.einsum("btn,nf->btf", xw, cos_b, precision=hi)
    im = -jnp.einsum("btn,nf->btf", xw, sin_b, precision=hi)
    diff_im_neg = jnp.einsum("btn,nf->btf", xd, sin_b, precision=hi)
    mag = jnp.sqrt(re * re + im * im)
    phase = jnp.arctan2(im, re + 1e-15)
    out = -phase * diff_im_neg / (mag + 0.001)
    period = 2.0 * np.pi * diff_im_neg / (mag + 0.001)
    return jnp.transpose(out, (0, 2, 1)), jnp.transpose(period, (0, 2, 1))


def _phase_wrap_error(out, ref, period):
    """|out - ref| after snapping off at most one +/-period (2*pi phase wrap)."""
    out = np.asarray(out, dtype=np.float64)
    ref = np.asarray(ref, dtype=np.float64)
    p = np.asarray(period, dtype=np.float64)
    safe = np.where(np.abs(p) > 1e-30, p, 1.0)
    k = np.where(np.abs(p) > 1e-30,
                 np.clip(np.round((out - ref) / safe), -1.0, 1.0), 0.0)
    return np.abs(out - ref - k * p)


if __name__ == "__main__":
    size = 64            # n_fft / window size; hop = 16
    B, W = 2, 256        # input signal: [B, W]
    key = jax.random.PRNGKey(0)
    x = jax.random.normal(key, (B, W), dtype=jnp.float32)

    ref, period = _reference(x, size)
    ref = np.asarray(jax.block_until_ready(ref))
    period = np.asarray(jax.block_until_ready(period))

    expected_shape = (B, size // 2 + 1, 1 + W // (size // 4))

    # float32 operands: tight, phase-wrap-aware check against the reference.
    # (|period| >= 2*|ref|, so the tolerance is ~1% relative plus a small atol;
    #  real bugs are orders of magnitude larger.)
    out_f32 = jax.block_until_ready(
        instantaneous_frequency(x, size, compute_dtype=jnp.float32))
    assert out_f32.shape == expected_shape, out_f32.shape
    err32 = _phase_wrap_error(out_f32, ref, period)
    tol32 = 3e-3 + 3e-3 * (np.abs(ref) + np.abs(period))
    assert np.all(err32 <= tol32), \
        f"f32 path: max excess error {float(np.max(err32 - tol32))}"

    # bfloat16 operands (default, full-rate MXU): looser sanity check — input
    # quantization adds ~1%-level phase noise on unlucky low-magnitude bins,
    # so check the bulk of elements with a scale-aware tolerance.
    out_bf16 = jax.block_until_ready(instantaneous_frequency(x, size))
    assert out_bf16.shape == expected_shape, out_bf16.shape
    assert np.all(np.isfinite(np.asarray(out_bf16)))
    err16 = _phase_wrap_error(out_bf16, ref, period)
    tol16 = 5e-2 * (1.0 + np.abs(ref) + np.abs(period))
    frac_ok = float(np.mean(err16 <= tol16))
    assert frac_ok >= 0.95, f"bf16 path: only {frac_ok:.3f} within tolerance"

    print("KERNEL_OK")
</pallas_src>

<mosaic_0001>
module attributes {stable_mosaic.version = 11 : i64} {
  func.func @_if_kernel(%arg0: i32, %arg1: i32, %arg2: memref<24x64xf32, #tpu.memory_space<vmem>>, %arg3: memref<64x384xf32, #tpu.memory_space<vmem>>, %arg4: memref<24x128xf32, #tpu.memory_space<vmem>>) attributes {dimension_semantics = [#tpu.dimension_semantics<parallel>, #tpu.dimension_semantics<arbitrary>], iteration_bounds = array<i64: 2, 1>, scalar_prefetch = 0 : i64, scratch_operands = 0 : i64, tpu.core_type = #tpu.core_type<tc>, window_params = [{transform_indices = @transform_0, window_bounds = array<i64: 24, 64>}, {transform_indices = @transform_1, window_bounds = array<i64: 64, 384>}, {transform_indices = @transform_2, window_bounds = array<i64: 24, 128>}]} {
    %c0 = arith.constant 0 : index
    %c0_0 = arith.constant 0 : index
    %0 = vector.load %arg2[%c0, %c0_0] : memref<24x64xf32, #tpu.memory_space<vmem>>, vector<24x64xf32>
    %c0_1 = arith.constant 0 : index
    %c0_2 = arith.constant 0 : index
    %1 = vector.load %arg3[%c0_1, %c0_2] : memref<64x384xf32, #tpu.memory_space<vmem>>, vector<64x384xf32>
    %cst = arith.constant dense<0.000000e+00> : vector<24x384xf32>
    %2 = tpu.matmul %0, %1, %cst {dimension_numbers = #tpu.dot_dimension_numbers<[1], [0], [0], [1], [0, 0, 1, 1], [], []>, precision = #tpu.contract_precision<fp32>} : vector<24x64xf32>, vector<64x384xf32>, vector<24x384xf32> -> vector<24x384xf32>
    %3 = vector.extract_strided_slice %2 {offsets = [0, 0], sizes = [24, 128], strides = [1, 1]} : vector<24x384xf32> to vector<24x128xf32>
    %4 = vector.extract_strided_slice %2 {offsets = [0, 128], sizes = [24, 128], strides = [1, 1]} : vector<24x384xf32> to vector<24x128xf32>
    %cst_3 = arith.constant 0.000000e+00 : f32
    %5 = vector.broadcast %cst_3 : f32 to vector<24x128xf32>
    %6 = arith.subf %5, %4 : vector<24x128xf32>
    %7 = vector.extract_strided_slice %2 {offsets = [0, 256], sizes = [24, 128], strides = [1, 1]} : vector<24x384xf32> to vector<24x128xf32>
    %8 = arith.mulf %3, %3 : vector<24x128xf32>
    %9 = arith.mulf %6, %6 : vector<24x128xf32>
    %10 = arith.addf %8, %9 : vector<24x128xf32>
    %11 = math.sqrt %10 : vector<24x128xf32>
    %cst_4 = arith.constant 1.000000e-15 : f32
    %12 = vector.broadcast %cst_4 : f32 to vector<24x128xf32>
    %13 = arith.addf %3, %12 : vector<24x128xf32>
    %14 = math.atan2 %6, %13 : vector<24x128xf32>
    %cst_5 = arith.constant 1.000000e-03 : f32
    %15 = vector.broadcast %cst_5 : f32 to vector<24x128xf32>
    %16 = arith.addf %11, %15 : vector<24x128xf32>
    %17 = tpu.reciprocal %16 {approx = true} : vector<24x128xf32> -> vector<24x128xf32>
    %cst_6 = arith.constant 0.000000e+00 : f32
    %18 = vector.broadcast %cst_6 : f32 to vector<24x128xf32>
    %19 = arith.subf %18, %14 : vector<24x128xf32>
    %20 = arith.mulf %19, %7 : vector<24x128xf32>
    %21 = arith.mulf %20, %17 : vector<24x128xf32>
    %c0_7 = arith.constant 0 : index
    %c0_8 = arith.constant 0 : index
    %22 = vector.load %arg4[%c0_7, %c0_8] : memref<24x128xf32, #tpu.memory_space<vmem>>, vector<24x128xf32>
    tpu.vector_store %arg4[%c0_7, %c0_8], %21 {strides = array<i32>} : memref<24x128xf32, #tpu.memory_space<vmem>>, vector<24x128xf32>,
    return
  }
  func.func @transform_0(%arg0: i32, %arg1: i32) -> (i32, i32) {
    %c0_i32 = arith.constant 0 : i32
    %c0_i32_0 = arith.constant 0 : i32
    return %arg0, %c0_i32 : i32, i32
  }
  func.func @transform_1(%arg0: i32, %arg1: i32) -> (i32, i32) {
    %c0_i32 = arith.constant 0 : i32
    %c0_i32_0 = arith.constant 0 : i32
    return %c0_i32, %arg1 : i32, i32
  }
  func.func @transform_2(%arg0: i32, %arg1: i32) -> (i32, i32) {
    %c0_i32 = arith.constant 0 : i32
    return %arg0, %arg1 : i32, i32
  }
}

</mosaic_0001>

<llo_original>
// kernel: tpu_custom_call.1
$region0: #{tpu_custom_call.1}
  #allocation0 [shape = 'u32[]', space=smem, size = 0x4, offset = 0x4, fixed_abs, tag = 'smem constant byte address 0x4 - core index']
  #allocation1 [shape = 'u32[144,128]{1,0:T(1,128)}', space=vmem, size = 0x12000, scoped, tag = 'internal scratch']
  %s0 = inlined_call_operand.hbm [shape: f32[48,64], index: 0, kind: input, shape index: {}]
  %s1 = inlined_call_operand.hbm [shape: f32[64,384], index: 1, kind: input, shape index: {}]
  %s2 = inlined_call_operand.hbm [shape: f32[48,128], index: 2, kind: output, shape index: {}]
  %s3 = sld [smem:[#allocation0]]
  $region49: #{tpu_custom_call.1} parent=0
    _
  %s5 = ssub.s32 1, %s3
  %s6 = scalar_select 0, %s5, %s3
  $region1: #{tpu_custom_call.1} parent=0
    #allocation2 [shape = 'u8[24576]{0}', space=vmem, size = 0x6000, scoped, tag = 'input window, operand 0']
    #allocation3 [shape = 's32[2]{0}', space=sflag, size = 0x8, scoped, tag = 'scoped memory for tpu_custom_call.1']
    #allocation4 [shape = 's32[2]{0}', space=sflag, size = 0x8, scoped, tag = 'scoped memory for tpu_custom_call.1']
    #allocation5 [shape = 'u8[98304]{0}', space=vmem, size = 0x18000, scoped, tag = 'input window, operand 1, single buffered']
    #allocation6 [shape = 's32[1]{0}', space=sflag, size = 0x4, scoped, tag = 'scoped memory for tpu_custom_call.1']
    #allocation7 [shape = 'u8[24576]{0}', space=vmem, size = 0x6000, scoped, tag = 'output window, operand 0']
    %7 = vsyncpa [#allocation3], 0
    %s8 = scalar_lea.sflag [#allocation3], 1
    %9 = vsyncpa %s8, 0
    %10 = vsyncpa [#allocation6], 0
    %11 = vsyncpa [#allocation4], 0
    %s12 = scalar_lea.sflag [#allocation4], 1
    %13 = vsyncpa %s12, 0
    loop: start=0, step=1, limit=4
    $region2: #{tpu_custom_call.1} parent=1 // loop_pre_header
      _
    $region3: #{tpu_custom_call.1} parent=1 // loop_header
      %s15 = sphi 0, %s19
      %p16 = scmp.ge.s32.totalorder %s15, 4
      %s22 = sphi 0, %s34
      %s23 = sphi 0, %s30
      %s24 = sphi 0, %s22
      %s25 = sphi 0, %s23
      %s26 = sphi 0, %s24
      %s27 = sphi 0, %s25
      %s37 = sphi 0, %s39
      %s40 = sphi 0, %s37
      %s41 = sphi 0, %s40
      %s57 = sphi 0, %s41
      %s63 = sphi 0, %s65
      %s66 = sphi 0, %s63
      %s67 = sphi 0, %s66
      %s83 = sphi 0, %s67
      %s91 = sphi 0, %s93
      %s94 = sphi 0, %s91
      %s95 = sphi 0, %s94
      %s111 = sphi 0, %s95
    $region4: #{tpu_custom_call.1} parent=1 // loop_header_branch
      %18 = sbr.rel (%p16) target = $region8
    $region5: #{tpu_custom_call.1} parent=1 // loop_body
      %s20 = ssub.s32 %s15, 1
      %s21 = ssub.s32 %s15, 2
      %s28 = sadd.s32 1, %s23
      %p29 = scmp.ge.s32.totalorder %s28, 1
      %s30 = scalar_select %p29, 0, %s28
      %s31 = sadd.s32 1, %s22
      %s32 = scalar_select %p29, %s31, %s22
      %p33 = scmp.ge.s32.totalorder %s32, 2
      %s34 = scalar_select %p33, 0, %s32
      %s35 = ssub.s32 %s22, %s34
      %p36 = scmp.eq.s32.totalorder %s35, 0
      %s38 = sadd.s32 %s37, 1
      %s39 = scalar_select %p36, %s37, %s38
      %p42 = pneg %p36
      %p43 = scmp.eq.s32.totalorder %s15, 1
      %p44 = por %p42, %p43
      %p45 = scmp.ne.s32.totalorder %s37, %s40
      %p46 = scmp.eq.s32.totalorder %s15, 0
      %p47 = por %p45, %p46
      %p48 = scmp.ne.s32.totalorder %s37, %s40
      %p49 = scmp.eq.s32.totalorder %s20, 1
      %p50 = por %p48, %p49
      %p51 = scmp.ne.s32.totalorder %s40, %s41
      %p52 = scmp.eq.s32.totalorder %s20, 0
      %p53 = por %p51, %p52
      %p54 = scmp.ne.s32.totalorder %s40, %s41
      %p55 = scmp.eq.s32.totalorder %s21, 1
      %p56 = por %p54, %p55
      %p58 = scmp.ne.s32.totalorder %s41, %s57
      %p59 = scmp.eq.s32.totalorder %s21, 0
      %p60 = por %p58, %p59
      %s61 = ssub.s32 %s23, %s30
      %p62 = scmp.eq.s32.totalorder %s61, 0
      %s64 = sadd.s32 %s63, 1
      %s65 = scalar_select %p62, %s63, %s64
      %p68 = pneg %p62
      %p69 = scmp.eq.s32.totalorder %s15, 1
      %p70 = por %p68, %p69
      %p71 = scmp.ne.s32.totalorder %s63, %s66
      %p72 = scmp.eq.s32.totalorder %s15, 0
      %p73 = por %p71, %p72
      %p74 = scmp.ne.s32.totalorder %s63, %s66
      %p75 = scmp.eq.s32.totalorder %s20, 1
      %p76 = por %p74, %p75
      %p77 = scmp.ne.s32.totalorder %s66, %s67
      %p78 = scmp.eq.s32.totalorder %s20, 0
      %p79 = por %p77, %p78
      %p80 = scmp.ne.s32.totalorder %s66, %s67
      %p81 = scmp.eq.s32.totalorder %s21, 1
      %p82 = por %p80, %p81
      %p84 = scmp.ne.s32.totalorder %s67, %s83
      %p85 = scmp.eq.s32.totalorder %s21, 0
      %p86 = por %p84, %p85
      %s87 = ssub.s32 %s22, %s34
      %s88 = ssub.s32 %s23, %s30
      %s89 = sor.u32 %s87, %s88
      %p90 = scmp.eq.s32.totalorder %s89, 0
      %s92 = sadd.s32 %s91, 1
      %s93 = scalar_select %p90, %s91, %s92
      %p96 = pneg %p90
      %p97 = scmp.eq.s32.totalorder %s15, 1
      %p98 = por %p96, %p97
      %p99 = scmp.ne.s32.totalorder %s91, %s94
      %p100 = scmp.eq.s32.totalorder %s15, 0
      %p101 = por %p99, %p100
      %p102 = scmp.ne.s32.totalorder %s91, %s94
      %p103 = scmp.eq.s32.totalorder %s20, 1
      %p104 = por %p102, %p103
      %p105 = scmp.ne.s32.totalorder %s94, %s95
      %p106 = scmp.eq.s32.totalorder %s20, 0
      %p107 = por %p105, %p106
      %p108 = scmp.ne.s32.totalorder %s94, %s95
      %p109 = scmp.eq.s32.totalorder %s21, 1
      %p110 = por %p108, %p109
      %p112 = scmp.ne.s32.totalorder %s95, %s111
      %p113 = scmp.eq.s32.totalorder %s21, 0
      %p114 = por %p112, %p113
      %p115 = scmp.le.s32.totalorder 1, %s15
      %p116 = scmp.lt.s32.totalorder %s15, 3
      %p117 = pnand %p115, %p116
      %p118 = pneg %p117
      // Predicated region
      $region9: #{tpu_custom_call.1} parent=5 // pred_check
        _
      $region10: #{tpu_custom_call.1} parent=5 // pred_check_branch
        %120 = sbr.rel (%p117) target = $region12
      $region11: #{tpu_custom_call.1} parent=5 // pred_region
        %s121 = ssub.s32 %s15, 1
        // Predicated region
        $region13: #{tpu_custom_call.1} parent=11 // pred_check
          %p122 = pneg %p79
        $region14: #{tpu_custom_call.1} parent=11 // pred_check_branch
          %124 = sbr.rel (%p122) target = $region16
        $region15: #{tpu_custom_call.1} parent=11 // pred_region
          %s125 = smul.u32 3, %s25
          %s127 = ssub.s32 3072, 3072
          %128 = vsyncadd [#allocation6], %s127
          %s129 = smul.addr %s125, 128
          %s130 = scalar_lea.hbm %s1, %s129
          %s131 = sshll.u32 [#allocation5], 4
          %s132 = int_to_ptr.vmem [resolvable:$true] %s131
          %137 = dma.hbm_to_vmem [thread:$0]  %s130, 3072, %s132, [#allocation6], 384, 384, 24
        $region16: #{tpu_custom_call.1} parent=11 // pred_fallthru
          _
      $region12: #{tpu_custom_call.1} parent=5 // pred_fallthru
        _
      %p138 = scmp.lt.s32.totalorder %s15, 2
      // Predicated region
      $region17: #{tpu_custom_call.1} parent=5 // pred_check
        %p139 = pneg %p138
      $region18: #{tpu_custom_call.1} parent=5 // pred_check_branch
        %141 = sbr.rel (%p139) target = $region20
      $region19: #{tpu_custom_call.1} parent=5 // pred_region
        // Predicated region
        $region21: #{tpu_custom_call.1} parent=19 // pred_check
          %p142 = pneg %p47
        $region22: #{tpu_custom_call.1} parent=19 // pred_check_branch
          %144 = sbr.rel (%p142) target = $region24
        $region23: #{tpu_custom_call.1} parent=19 // pred_region
          %s145 = sand.u32 %s37, 1
          %s146 = scalar_lea.sflag [#allocation3], %s145
          %s147 = sand.u32 %s37, 1
          %s148 = smul.addr %s147, 24
          %s149 = scalar_lea.vmem [#allocation2], %s148
          %s150 = smul.u32 3, %s22
          %s152 = ssub.s32 384, 384
          %153 = vsyncadd %s146, %s152
          %s154 = smul.addr %s150, 128
          %s155 = scalar_lea.hbm %s0, %s154
          %s156 = sshll.u32 %s149, 4
          %s157 = int_to_ptr.vmem [resolvable:$true] %s156
          %162 = dma.hbm_to_vmem [thread:$0]  %s155, 384, %s157, %s146, 128, 128, 8
        $region24: #{tpu_custom_call.1} parent=19 // pred_fallthru
          _
      $region20: #{tpu_custom_call.1} parent=5 // pred_fallthru
        _
      %p163 = scmp.le.s32.totalorder 1, %s15
      %p164 = scmp.lt.s32.totalorder %s15, 3
      %p165 = pnand %p163, %p164
      %p166 = pneg %p165
      // Predicated region
      $region25: #{tpu_custom_call.1} parent=5 // pred_check
        _
      $region26: #{tpu_custom_call.1} parent=5 // pred_check_branch
        %168 = sbr.rel (%p165) target = $region28
      $region27: #{tpu_custom_call.1} parent=5 // pred_region
        %s169 = ssub.s32 %s15, 1
        %s170 = sand.u32 %s40, 1
        %s171 = scalar_lea.sflag [#allocation3], %s170
        %s172 = sand.u32 %s40, 1
        %s173 = smul.addr %s172, 24
        %s174 = scalar_lea.vmem [#allocation2], %s173
        // Predicated region
        $region29: #{tpu_custom_call.1} parent=27 // pred_check
          %p175 = pneg %p53
        $region30: #{tpu_custom_call.1} parent=27 // pred_check_branch
          %177 = sbr.rel (%p175) target = $region32
        $region31: #{tpu_custom_call.1} parent=27 // pred_region
          %178 = dma.done %s171, 384
        $region32: #{tpu_custom_call.1} parent=27 // pred_fallthru
          _
        // Predicated region
        $region33: #{tpu_custom_call.1} parent=27 // pred_check
          %p179 = pneg %p79
        $region34: #{tpu_custom_call.1} parent=27 // pred_check_branch
          %181 = sbr.rel (%p179) target = $region36
        $region35: #{tpu_custom_call.1} parent=27 // pred_region
          %182 = dma.done [#allocation6], 3072
        $region36: #{tpu_custom_call.1} parent=27 // pred_fallthru
          _
        %s183 = sand.u32 %s40, 1
        %s184 = scalar_lea.sflag [#allocation3], %s183
        %s185 = sand.u32 %s40, 1
        %s186 = smul.addr %s185, 24
        %s187 = scalar_lea.vmem [#allocation2], %s186
        %p188 = pneg %p53
        %p189 = pneg %p50
        %p190 = pneg %p79
        %p191 = pneg %p76
        %p192 = pneg %p107
        %p193 = pneg %p104
        %s194 = sand.u32 %s94, 1
        %s195 = scalar_lea.sflag [#allocation4], %s194
        %s196 = sand.u32 %s94, 1
        %s197 = smul.addr %s196, 24
        %s198 = scalar_lea.vmem [#allocation7], %s197
        %s199 = smul.u32 3, %s24
        %s200 = smul.u32 3, %s25
        %s201 = smul.u32 3, %s24
        %v202 = vld [vmem:[%s174] sm:$0xff]
        %v203 = vld [vmem:[%s174 + $0x8] sm:$0xff]
        %v204 = vld [vmem:[%s174 + $0x10] sm:$0xff]
        %v205 = vld [vmem:[#allocation5] sm:$0xff]
        %v206 = vld [vmem:[#allocation5 + $0x8] sm:$0xff]
        %v207 = vld [vmem:[#allocation5 + $0x10] sm:$0xff]
        %v208 = vld [vmem:[#allocation5 + $0x18] sm:$0xff]
        %v209 = vld [vmem:[#allocation5 + $0x20] sm:$0xff]
        %v210 = vld [vmem:[#allocation5 + $0x28] sm:$0xff]
        %v211 = vld [vmem:[#allocation5 + $0x30] sm:$0xff]
        %v212 = vld [vmem:[#allocation5 + $0x38] sm:$0xff]
        %v213 = vld [vmem:[#allocation5 + $0x40] sm:$0xff]
        %v214 = vld [vmem:[#allocation5 + $0x48] sm:$0xff]
        %v215 = vld [vmem:[#allocation5 + $0x50] sm:$0xff]
        %v216 = vld [vmem:[#allocation5 + $0x58] sm:$0xff]
        %v217 = vld [vmem:[#allocation5 + $0x60] sm:$0xff]
        %v218 = vld [vmem:[#allocation5 + $0x68] sm:$0xff]
        %v219 = vld [vmem:[#allocation5 + $0x70] sm:$0xff]
        %v220 = vld [vmem:[#allocation5 + $0x78] sm:$0xff]
        %v221 = vld [vmem:[#allocation5 + $0x80] sm:$0xff]
        %v222 = vld [vmem:[#allocation5 + $0x88] sm:$0xff]
        %v223 = vld [vmem:[#allocation5 + $0x90] sm:$0xff]
        %v224 = vld [vmem:[#allocation5 + $0x98] sm:$0xff]
        %v225 = vld [vmem:[#allocation5 + $0xa0] sm:$0xff]
        %v226 = vld [vmem:[#allocation5 + $0xa8] sm:$0xff]
        %v227 = vld [vmem:[#allocation5 + $0xb0] sm:$0xff]
        %v228 = vld [vmem:[#allocation5 + $0xb8] sm:$0xff]
        %vm229 = vcmask 523264
        %v231 = vsel %vm229, %v202, 0
        %v234 = vsel %vm229, %v203, 0
        %v237 = vsel %vm229, %v204, 0
        %v239 = vand.u32 %v206, 4294901760
        %240 = vmatprep.subr.mxu0 %v239
        %v241 = vand.u32 %v205, 4294901760
        %242 = vmatpush1.msra.mxu0 %v241
        %v243 = vand.u32 %v209, 4294901760
        %244 = vmatprep.subr.mxu0 %v243
        %v245 = vand.u32 %v208, 4294901760
        %246 = vmatpush1.msra.mxu0 %v245
        %v247 = vand.u32 %v212, 4294901760
        %248 = vmatprep.subr.mxu0 %v247
        %v249 = vand.u32 %v211, 4294901760
        %250 = vmatpush1.msra.mxu0 %v249
        %v251 = vand.u32 %v215, 4294901760
        %252 = vmatprep.subr.mxu0 %v251
        %v253 = vand.u32 %v214, 4294901760
        %254 = vmatpush1.msra.mxu0 %v253
        %v255 = vand.u32 %v218, 4294901760
        %256 = vmatprep.subr.mxu0 %v255
        %v257 = vand.u32 %v217, 4294901760
        %258 = vmatpush1.msra.mxu0 %v257
        %v259 = vand.u32 %v221, 4294901760
        %260 = vmatprep.subr.mxu0 %v259
        %v261 = vand.u32 %v220, 4294901760
        %262 = vmatpush1.msra.mxu0 %v261
        %v263 = vand.u32 %v224, 4294901760
        %264 = vmatprep.subr.mxu0 %v263
        %v265 = vand.u32 %v223, 4294901760
        %266 = vmatpush1.msra.mxu0 %v265
        %v267 = vand.u32 %v227, 4294901760
        %268 = vmatprep.subr.mxu0 %v267
        %v269 = vand.u32 %v226, 4294901760
        %270 = vmatpush1.msra.mxu0 %v269
        %271 = vmatprep.subr.mxu0 0.0
        %272 = vmatpush1.msra.mxu0 0.0
        %273 = vmatprep.subr.mxu0 0.0
        %274 = vmatpush1.msra.mxu0 0.0
        %275 = vmatprep.subr.mxu0 0.0
        %276 = vmatpush1.msra.mxu0 0.0
        %277 = vmatprep.subr.mxu0 0.0
        %278 = vmatpush1.msra.mxu0 0.0
        %279 = vmatprep.subr.mxu0 0.0
        %280 = vmatpush1.msra.mxu0 0.0
        %281 = vmatprep.subr.mxu0 0.0
        %282 = vmatpush1.msra.mxu0 0.0
        %283 = vmatprep.subr.mxu0 0.0
        %284 = vmatpush1.msra.mxu0 0.0
        %285 = vmatprep.subr.mxu0 0.0
        %286 = vmatpush1.msra.mxu0 0.0
        %287 = vmatprep.subr.mxu0 0.0
        %288 = vmatpush1.msra.mxu0 0.0
        %289 = vmatprep.subr.mxu0 0.0
        %290 = vmatpush1.msra.mxu0 0.0
        %291 = vmatprep.subr.mxu0 0.0
        %292 = vmatpush1.msra.mxu0 0.0
        %293 = vmatprep.subr.mxu0 0.0
        %294 = vmatpush1.msra.mxu0 0.0
        %295 = vmatprep.subr.mxu0 0.0
        %296 = vmatpush1.msra.mxu0 0.0
        %297 = vmatprep.subr.mxu0 0.0
        %298 = vmatpush1.msra.mxu0 0.0
        %299 = vmatprep.subr.mxu0 0.0
        %300 = vmatpush1.msra.mxu0 0.0
        %301 = vmatprep.subr.mxu0 0.0
        %302 = vmatpush1.msra.mxu0 0.0
        %303 = vmatprep.subr.mxu0 0.0
        %304 = vmatpush1.msra.mxu0 0.0
        %305 = vmatprep.subr.mxu0 0.0
        %306 = vmatpush1.msra.mxu0 0.0
        %307 = vmatprep.subr.mxu0 0.0
        %308 = vmatpush1.msra.mxu0 0.0
        %309 = vmatprep.subr.mxu0 0.0
        %310 = vmatpush1.msra.mxu0 0.0
        %311 = vmatprep.subr.mxu0 0.0
        %312 = vmatpush1.msra.mxu0 0.0
        %313 = vmatprep.subr.mxu0 0.0
        %314 = vmatpush1.msra.mxu0 0.0
        %315 = vmatprep.subr.mxu0 0.0
        %316 = vmatpush1.msra.mxu0 0.0
        %317 = vmatprep.subr.mxu0 0.0
        %318 = vmatpush1.msra.mxu0 0.0
        %319 = vmatprep.mubr.f32.mxu0 0.0
        %v320 = vand.u32 %v231, 4294901760
        %v321 = vsub.f32 %v231, %v320
        %v322 = vand.u32 %v321, 4294901760
        %v323 = vsub.f32 %v321, %v322
        %v324 = vand.u32 %v323, 4294901760
        %325 = vmatmul.mubr.f32.gmra.mrb[0].mxu0 %v324
        %v326 = vpop.f32.mrb[0].mxu0
        %v327 = vadd.f32 0.0, %v326
        %v328 = vpop.f32.mrb[0].mxu0
        %v329 = vadd.f32 0.0, %v328
        %330 = vmatprep.mubr.f32.mxu0 0.0
        %v331 = vand.u32 %v234, 4294901760
        %v332 = vsub.f32 %v234, %v331
        %v333 = vand.u32 %v332, 4294901760
        %v334 = vsub.f32 %v332, %v333
        %v335 = vand.u32 %v334, 4294901760
        %336 = vmatmul.mubr.f32.gmra.mrb[0].mxu0 %v335
        %v337 = vpop.f32.mrb[0].mxu0
        %v338 = vadd.f32 0.0, %v337
        %v339 = vpop.f32.mrb[0].mxu0
        %v340 = vadd.f32 0.0, %v339
        %341 = vmatprep.mubr.f32.mxu0 0.0
        %v342 = vand.u32 %v237, 4294901760
        %v343 = vsub.f32 %v237, %v342
        %v344 = vand.u32 %v343, 4294901760
        %v345 = vsub.f32 %v343, %v344
        %v346 = vand.u32 %v345, 4294901760
        %347 = vmatmul.mubr.f32.gmra.mrb[0].mxu0 %v346
        %v348 = vpop.f32.mrb[0].mxu0
        %v349 = vadd.f32 0.0, %v348
        %v350 = vpop.f32.mrb[0].mxu0
        %v351 = vadd.f32 0.0, %v350
        %352 = vdwg.mxu0
        %v353 = vand.u32 %v206, 4294901760
        %v354 = vsub.f32 %v206, %v353
        %v355 = vand.u32 %v354, 4294901760
        %v356 = vsub.f32 %v354, %v355
        %v357 = vand.u32 %v356, 4294901760
        %358 = vmatprep.subr.mxu0 %v357
        %v359 = vand.u32 %v205, 4294901760
        %v360 = vsub.f32 %v205, %v359
        %v361 = vand.u32 %v360, 4294901760
        %v362 = vsub.f32 %v360, %v361
        %v363 = vand.u32 %v362, 4294901760
        %364 = vmatpush1.msra.mxu0 %v363
        %v365 = vand.u32 %v209, 4294901760
        %v366 = vsub.f32 %v209, %v365
        %v367 = vand.u32 %v366, 4294901760
        %v368 = vsub.f32 %v366, %v367
        %v369 = vand.u32 %v368, 4294901760
        %370 = vmatprep.subr.mxu0 %v369
        %v371 = vand.u32 %v208, 4294901760
        %v372 = vsub.f32 %v208, %v371
        %v373 = vand.u32 %v372, 4294901760
        %v374 = vsub.f32 %v372, %v373
        %v375 = vand.u32 %v374, 4294901760
        %376 = vmatpush1.msra.mxu0 %v375
        %v377 = vand.u32 %v212, 4294901760
        %v378 = vsub.f32 %v212, %v377
        %v379 = vand.u32 %v378, 4294901760
        %v380 = vsub.f32 %v378, %v379
        %v381 = vand.u32 %v380, 4294901760
        %382 = vmatprep.subr.mxu0 %v381
        %v383 = vand.u32 %v211, 4294901760
        %v384 = vsub.f32 %v211, %v383
        %v385 = vand.u32 %v384, 4294901760
        %v386 = vsub.f32 %v384, %v385
        %v387 = vand.u32 %v386, 4294901760
        %388 = vmatpush1.msra.mxu0 %v387
        %v389 = vand.u32 %v215, 4294901760
        %v390 = vsub.f32 %v215, %v389
        %v391 = vand.u32 %v390, 4294901760
        %v392 = vsub.f32 %v390, %v391
        %v393 = vand.u32 %v392, 4294901760
        %394 = vmatprep.subr.mxu0 %v393
        %v395 = vand.u32 %v214, 4294901760
        %v396 = vsub.f32 %v214, %v395
        %v397 = vand.u32 %v396, 4294901760
        %v398 = vsub.f32 %v396, %v397
        %v399 = vand.u32 %v398, 4294901760
        %400 = vmatpush1.msra.mxu0 %v399
        %v401 = vand.u32 %v218, 4294901760
        %v402 = vsub.f32 %v218, %v401
        %v403 = vand.u32 %v402, 4294901760
        %v404 = vsub.f32 %v402, %v403
        %v405 = vand.u32 %v404, 4294901760
        %406 = vmatprep.subr.mxu0 %v405
        %v407 = vand.u32 %v217, 4294901760
        %v408 = vsub.f32 %v217, %v407
        %v409 = vand.u32 %v408, 4294901760
        %v410 = vsub.f32 %v408, %v409
        %v411 = vand.u32 %v410, 4294901760
        %412 = vmatpush1.msra.mxu0 %v411
        %v413 = vand.u32 %v221, 4294901760
        %v414 = vsub.f32 %v221, %v413
        %v415 = vand.u32 %v414, 4294901760
        %v416 = vsub.f32 %v414, %v415
        %v417 = vand.u32 %v416, 4294901760
        %418 = vmatprep.subr.mxu0 %v417
        %v419 = vand.u32 %v220, 4294901760
        %v420 = vsub.f32 %v220, %v419
        %v421 = vand.u32 %v420, 4294901760
        %v422 = vsub.f32 %v420, %v421
        %v423 = vand.u32 %v422, 4294901760
        %424 = vmatpush1.msra.mxu0 %v423
        %v425 = vand.u32 %v224, 4294901760
        %v426 = vsub.f32 %v224, %v425
        %v427 = vand.u32 %v426, 4294901760
        %v428 = vsub.f32 %v426, %v427
        %v429 = vand.u32 %v428, 4294901760
        %430 = vmatprep.subr.mxu0 %v429
        %v431 = vand.u32 %v223, 4294901760
        %v432 = vsub.f32 %v223, %v431
        %v433 = vand.u32 %v432, 4294901760
        %v434 = vsub.f32 %v432, %v433
        %v435 = vand.u32 %v434, 4294901760
        %436 = vmatpush1.msra.mxu0 %v435
        %v437 = vand.u32 %v227, 4294901760
        %v438 = vsub.f32 %v227, %v437
        %v439 = vand.u32 %v438, 4294901760
        %v440 = vsub.f32 %v438, %v439
        %v441 = vand.u32 %v440, 4294901760
        %442 = vmatprep.subr.mxu0 %v441
        %v443 = vand.u32 %v226, 4294901760
        %v444 = vsub.f32 %v226, %v443
        %v445 = vand.u32 %v444, 4294901760
        %v446 = vsub.f32 %v444, %v445
        %v447 = vand.u32 %v446, 4294901760
        %448 = vmatpush1.msra.mxu0 %v447
        %449 = vmatprep.subr.mxu0 0.0
        %450 = vmatpush1.msra.mxu0 0.0
        %451 = vmatprep.subr.mxu0 0.0
        %452 = vmatpush1.msra.mxu0 0.0
        %453 = vmatprep.subr.mxu0 0.0
        %454 = vmatpush1.msra.mxu0 0.0
        %455 = vmatprep.subr.mxu0 0.0
        %456 = vmatpush1.msra.mxu0 0.0
        %457 = vmatprep.subr.mxu0 0.0
        %458 = vmatpush1.msra.mxu0 0.0
        %459 = vmatprep.subr.mxu0 0.0
        %460 = vmatpush1.msra.mxu0 0.0
        %461 = vmatprep.subr.mxu0 0.0
        %462 = vmatpush1.msra.mxu0 0.0
        %463 = vmatprep.subr.mxu0 0.0
        %464 = vmatpush1.msra.mxu0 0.0
        %465 = vmatprep.subr.mxu0 0.0
        %466 = vmatpush1.msra.mxu0 0.0
        %467 = vmatprep.subr.mxu0 0.0
        %468 = vmatpush1.msra.mxu0 0.0
        %469 = vmatprep.subr.mxu0 0.0
        %470 = vmatpush1.msra.mxu0 0.0
        %471 = vmatprep.subr.mxu0 0.0
        %472 = vmatpush1.msra.mxu0 0.0
        %473 = vmatprep.subr.mxu0 0.0
        %474 = vmatpush1.msra.mxu0 0.0
        %475 = vmatprep.subr.mxu0 0.0
        %476 = vmatpush1.msra.mxu0 0.0
        %477 = vmatprep.subr.mxu0 0.0
        %478 = vmatpush1.msra.mxu0 0.0
        %479 = vmatprep.subr.mxu0 0.0
        %480 = vmatpush1.msra.mxu0 0.0
        %481 = vmatprep.subr.mxu0 0.0
        %482 = vmatpush1.msra.mxu0 0.0
        %483 = vmatprep.subr.mxu0 0.0
        %484 = vmatpush1.msra.mxu0 0.0
        %485 = vmatprep.subr.mxu0 0.0
        %486 = vmatpush1.msra.mxu0 0.0
        %487 = vmatprep.subr.mxu0 0.0
        %488 = vmatpush1.msra.mxu0 0.0
        %489 = vmatprep.subr.mxu0 0.0
        %490 = vmatpush1.msra.mxu0 0.0
        %491 = vmatprep.subr.mxu0 0.0
        %492 = vmatpush1.msra.mxu0 0.0
        %493 = vmatprep.subr.mxu0 0.0
        %494 = vmatpush1.msra.mxu0 0.0
        %495 = vmatprep.subr.mxu0 0.0
        %496 = vmatpush1.msra.mxu0 0.0
        %497 = vmatprep.mubr.f32.mxu0 0.0
        %v498 = vand.u32 %v231, 4294901760
        %499 = vmatmul.mubr.f32.gmra.mrb[0].mxu0 %v498
        %v500 = vpop.f32.mrb[0].mxu0
        %v501 = vadd.f32 %v327, %v500
        %v502 = vpop.f32.mrb[0].mxu0
        %v503 = vadd.f32 %v329, %v502
        %504 = vmatprep.mubr.f32.mxu0 0.0
        %v505 = vand.u32 %v234, 4294901760
        %506 = vmatmul.mubr.f32.gmra.mrb[0].mxu0 %v505
        %v507 = vpop.f32.mrb[0].mxu0
        %v508 = vadd.f32 %v338, %v507
        %v509 = vpop.f32.mrb[0].mxu0
        %v510 = vadd.f32 %v340, %v509
        %511 = vmatprep.mubr.f32.mxu0 0.0
        %v512 = vand.u32 %v237, 4294901760
        %513 = vmatmul.mubr.f32.gmra.mrb[0].mxu0 %v512
        %v514 = vpop.f32.mrb[0].mxu0
        %v515 = vadd.f32 %v349, %v514
        %v516 = vpop.f32.mrb[0].mxu0
        %v517 = vadd.f32 %v351, %v516
        %518 = vdwg.mxu0
        %v519 = vand.u32 %v206, 4294901760
        %v520 = vsub.f32 %v206, %v519
        %521 = vmatprep.subr.mxu0 %v520
        %v522 = vand.u32 %v205, 4294901760
        %v523 = vsub.f32 %v205, %v522
        %524 = vmatpush1.msra.mxu0 %v523
        %v525 = vand.u32 %v209, 4294901760
        %v526 = vsub.f32 %v209, %v525
        %527 = vmatprep.subr.mxu0 %v526
        %v528 = vand.u32 %v208, 4294901760
        %v529 = vsub.f32 %v208, %v528
        %530 = vmatpush1.msra.mxu0 %v529
        %v531 = vand.u32 %v212, 4294901760
        %v532 = vsub.f32 %v212, %v531
        %533 = vmatprep.subr.mxu0 %v532
        %v534 = vand.u32 %v211, 4294901760
        %v535 = vsub.f32 %v211, %v534
        %536 = vmatpush1.msra.mxu0 %v535
        %v537 = vand.u32 %v215, 4294901760
        %v538 = vsub.f32 %v215, %v537
        %539 = vmatprep.subr.mxu0 %v538
        %v540 = vand.u32 %v214, 4294901760
        %v541 = vsub.f32 %v214, %v540
        %542 = vmatpush1.msra.mxu0 %v541
        %v543 = vand.u32 %v218, 4294901760
        %v544 = vsub.f32 %v218, %v543
        %545 = vmatprep.subr.mxu0 %v544
        %v546 = vand.u32 %v217, 4294901760
        %v547 = vsub.f32 %v217, %v546
        %548 = vmatpush1.msra.mxu0 %v547
        %v549 = vand.u32 %v221, 4294901760
        %v550 = vsub.f32 %v221, %v549
        %551 = vmatprep.subr.mxu0 %v550
        %v552 = vand.u32 %v220, 4294901760
        %v553 = vsub.f32 %v220, %v552
        %554 = vmatpush1.msra.mxu0 %v553
        %v555 = vand.u32 %v224, 4294901760
        %v556 = vsub.f32 %v224, %v555
        %557 = vmatprep.subr.mxu0 %v556
        %v558 = vand.u32 %v223, 4294901760
        %v559 = vsub.f32 %v223, %v558
        %560 = vmatpush1.msra.mxu0 %v559
        %v561 = vand.u32 %v227, 4294901760
        %v562 = vsub.f32 %v227, %v561
        %563 = vmatprep.subr.mxu0 %v562
        %v564 = vand.u32 %v226, 4294901760
        %v565 = vsub.f32 %v226, %v564
        %566 = vmatpush1.msra.mxu0 %v565
        %567 = vmatprep.subr.mxu0 0.0
        %568 = vmatpush1.msra.mxu0 0.0
        %569 = vmatprep.subr.mxu0 0.0
        %570 = vmatpush1.msra.mxu0 0.0
        %571 = vmatprep.subr.mxu0 0.0
        %572 = vmatpush1.msra.mxu0 0.0
        %573 = vmatprep.subr.mxu0 0.0
        %574 = vmatpush1.msra.mxu0 0.0
        %575 = vmatprep.subr.mxu0 0.0
        %576 = vmatpush1.msra.mxu0 0.0
        %577 = vmatprep.subr.mxu0 0.0
        %578 = vmatpush1.msra.mxu0 0.0
        %579 = vmatprep.subr.mxu0 0.0
        %580 = vmatpush1.msra.mxu0 0.0
        %581 = vmatprep.subr.mxu0 0.0
        %582 = vmatpush1.msra.mxu0 0.0
        %583 = vmatprep.subr.mxu0 0.0
        %584 = vmatpush1.msra.mxu0 0.0
        %585 = vmatprep.subr.mxu0 0.0
        %586 = vmatpush1.msra.mxu0 0.0
        %587 = vmatprep.subr.mxu0 0.0
        %588 = vmatpush1.msra.mxu0 0.0
        %589 = vmatprep.subr.mxu0 0.0
        %590 = vmatpush1.msra.mxu0 0.0
        %591 = vmatprep.subr.mxu0 0.0
        %592 = vmatpush1.msra.mxu0 0.0
        %593 = vmatprep.subr.mxu0 0.0
        %594 = vmatpush1.msra.mxu0 0.0
        %595 = vmatprep.subr.mxu0 0.0
        %596 = vmatpush1.msra.mxu0 0.0
        %597 = vmatprep.subr.mxu0 0.0
        %598 = vmatpush1.msra.mxu0 0.0
        %599 = vmatprep.subr.mxu0 0.0
        %600 = vmatpush1.msra.mxu0 0.0
        %601 = vmatprep.subr.mxu0 0.0
        %602 = vmatpush1.msra.mxu0 0.0
        %603 = vmatprep.subr.mxu0 0.0
        %604 = vmatpush1.msra.mxu0 0.0
        %605 = vmatprep.subr.mxu0 0.0
        %606 = vmatpush1.msra.mxu0 0.0
        %607 = vmatprep.subr.mxu0 0.0
        %608 = vmatpush1.msra.mxu0 0.0
        %609 = vmatprep.subr.mxu0 0.0
        %610 = vmatpush1.msra.mxu0 0.0
        %611 = vmatprep.subr.mxu0 0.0
        %612 = vmatpush1.msra.mxu0 0.0
        %613 = vmatprep.subr.mxu0 0.0
        %614 = vmatpush1.msra.mxu0 0.0
        %615 = vmatprep.mubr.f32.mxu0 0.0
        %v616 = vand.u32 %v231, 4294901760
        %v617 = vsub.f32 %v231, %v616
        %618 = vmatmul.mubr.f32.gmra.mrb[0].mxu0 %v617
        %v619 = vpop.f32.mrb[0].mxu0
        %v620 = vadd.f32 %v501, %v619
        %v621 = vpop.f32.mrb[0].mxu0
        %v622 = vadd.f32 %v503, %v621
        %623 = vmatprep.mubr.f32.mxu0 0.0
        %v624 = vand.u32 %v234, 4294901760
        %v625 = vsub.f32 %v234, %v624
        %626 = vmatmul.mubr.f32.gmra.mrb[0].mxu0 %v625
        %v627 = vpop.f32.mrb[0].mxu0
        %v628 = vadd.f32 %v508, %v627
        %v629 = vpop.f32.mrb[0].mxu0
        %v630 = vadd.f32 %v510, %v629
        %631 = vmatprep.mubr.f32.mxu0 0.0
        %v632 = vand.u32 %v237, 4294901760
        %v633 = vsub.f32 %v237, %v632
        %634 = vmatmul.mubr.f32.gmra.mrb[0].mxu0 %v633
        %v635 = vpop.f32.mrb[0].mxu0
        %v636 = vadd.f32 %v515, %v635
        %v637 = vpop.f32.mrb[0].mxu0
        %v638 = vadd.f32 %v517, %v637
        %639 = vdwg.mxu0
        %v640 = vand.u32 %v206, 4294901760
        %641 = vmatprep.subr.mxu0 %v640
        %v642 = vand.u32 %v205, 4294901760
        %643 = vmatpush1.msra.mxu0 %v642
        %v644 = vand.u32 %v209, 4294901760
        %645 = vmatprep.subr.mxu0 %v644
        %v646 = vand.u32 %v208, 4294901760
        %647 = vmatpush1.msra.mxu0 %v646
        %v648 = vand.u32 %v212, 4294901760
        %649 = vmatprep.subr.mxu0 %v648
        %v650 = vand.u32 %v211, 4294901760
        %651 = vmatpush1.msra.mxu0 %v650
        %v652 = vand.u32 %v215, 4294901760
        %653 = vmatprep.subr.mxu0 %v652
        %v654 = vand.u32 %v214, 4294901760
        %655 = vmatpush1.msra.mxu0 %v654
        %v656 = vand.u32 %v218, 4294901760
        %657 = vmatprep.subr.mxu0 %v656
        %v658 = vand.u32 %v217, 4294901760
        %659 = vmatpush1.msra.mxu0 %v658
        %v660 = vand.u32 %v221, 4294901760
        %661 = vmatprep.subr.mxu0 %v660
        %v662 = vand.u32 %v220, 4294901760
        %663 = vmatpush1.msra.mxu0 %v662
        %v664 = vand.u32 %v224, 4294901760
        %665 = vmatprep.subr.mxu0 %v664
        %v666 = vand.u32 %v223, 4294901760
        %667 = vmatpush1.msra.mxu0 %v666
        %v668 = vand.u32 %v227, 4294901760
        %669 = vmatprep.subr.mxu0 %v668
        %v670 = vand.u32 %v226, 4294901760
        %671 = vmatpush1.msra.mxu0 %v670
        %672 = vmatprep.subr.mxu0 0.0
        %673 = vmatpush1.msra.mxu0 0.0
        %674 = vmatprep.subr.mxu0 0.0
        %675 = vmatpush1.msra.mxu0 0.0
        %676 = vmatprep.subr.mxu0 0.0
        %677 = vmatpush1.msra.mxu0 0.0
        %678 = vmatprep.subr.mxu0 0.0
        %679 = vmatpush1.msra.mxu0 0.0
        %680 = vmatprep.subr.mxu0 0.0
        %681 = vmatpush1.msra.mxu0 0.0
        %682 = vmatprep.subr.mxu0 0.0
        %683 = vmatpush1.msra.mxu0 0.0
        %684 = vmatprep.subr.mxu0 0.0
        %685 = vmatpush1.msra.mxu0 0.0
        %686 = vmatprep.subr.mxu0 0.0
        %687 = vmatpush1.msra.mxu0 0.0
        %688 = vmatprep.subr.mxu0 0.0
        %689 = vmatpush1.msra.mxu0 0.0
        %690 = vmatprep.subr.mxu0 0.0
        %691 = vmatpush1.msra.mxu0 0.0
        %692 = vmatprep.subr.mxu0 0.0
        %693 = vmatpush1.msra.mxu0 0.0
        %694 = vmatprep.subr.mxu0 0.0
        %695 = vmatpush1.msra.mxu0 0.0
        %696 = vmatprep.subr.mxu0 0.0
        %697 = vmatpush1.msra.mxu0 0.0
        %698 = vmatprep.subr.mxu0 0.0
        %699 = vmatpush1.msra.mxu0 0.0
        %700 = vmatprep.subr.mxu0 0.0
        %701 = vmatpush1.msra.mxu0 0.0
        %702 = vmatprep.subr.mxu0 0.0
        %703 = vmatpush1.msra.mxu0 0.0
        %704 = vmatprep.subr.mxu0 0.0
        %705 = vmatpush1.msra.mxu0 0.0
        %706 = vmatprep.subr.mxu0 0.0
        %707 = vmatpush1.msra.mxu0 0.0
        %708 = vmatprep.subr.mxu0 0.0
        %709 = vmatpush1.msra.mxu0 0.0
        %710 = vmatprep.subr.mxu0 0.0
        %711 = vmatpush1.msra.mxu0 0.0
        %712 = vmatprep.subr.mxu0 0.0
        %713 = vmatpush1.msra.mxu0 0.0
        %714 = vmatprep.subr.mxu0 0.0
        %715 = vmatpush1.msra.mxu0 0.0
        %716 = vmatprep.subr.mxu0 0.0
        %717 = vmatpush1.msra.mxu0 0.0
        %718 = vmatprep.subr.mxu0 0.0
        %719 = vmatpush1.msra.mxu0 0.0
        %720 = vmatprep.mubr.f32.mxu0 0.0
        %v721 = vand.u32 %v231, 4294901760
        %v722 = vsub.f32 %v231, %v721
        %v723 = vand.u32 %v722, 4294901760
        %724 = vmatmul.mubr.f32.gmra.mrb[0].mxu0 %v723
        %v725 = vpop.f32.mrb[0].mxu0
        %v726 = vadd.f32 %v620, %v725
        %v727 = vpop.f32.mrb[0].mxu0
        %v728 = vadd.f32 %v622, %v727
        %729 = vmatprep.mubr.f32.mxu0 0.0
        %v730 = vand.u32 %v234, 4294901760
        %v731 = vsub.f32 %v234, %v730
        %v732 = vand.u32 %v731, 4294901760
        %733 = vmatmul.mubr.f32.gmra.mrb[0].mxu0 %v732
        %v734 = vpop.f32.mrb[0].mxu0
        %v735 = vadd.f32 %v628, %v734
        %v736 = vpop.f32.mrb[0].mxu0
        %v737 = vadd.f32 %v630, %v736
        %738 = vmatprep.mubr.f32.mxu0 0.0
        %v739 = vand.u32 %v237, 4294901760
        %v740 = vsub.f32 %v237, %v739
        %v741 = vand.u32 %v740, 4294901760
        %742 = vmatmul.mubr.f32.gmra.mrb[0].mxu0 %v741
        %v743 = vpop.f32.mrb[0].mxu0
        %v744 = vadd.f32 %v636, %v743
        %v745 = vpop.f32.mrb[0].mxu0
        %v746 = vadd.f32 %v638, %v745
        %747 = vdwg.mxu0
        %v748 = vand.u32 %v206, 4294901760
        %v749 = vsub.f32 %v206, %v748
        %v750 = vand.u32 %v749, 4294901760
        %751 = vmatprep.subr.mxu0 %v750
        %v752 = vand.u32 %v205, 4294901760
        %v753 = vsub.f32 %v205, %v752
        %v754 = vand.u32 %v753, 4294901760
        %755 = vmatpush1.msra.mxu0 %v754
        %v756 = vand.u32 %v209, 4294901760
        %v757 = vsub.f32 %v209, %v756
        %v758 = vand.u32 %v757, 4294901760
        %759 = vmatprep.subr.mxu0 %v758
        %v760 = vand.u32 %v208, 4294901760
        %v761 = vsub.f32 %v208, %v760
        %v762 = vand.u32 %v761, 4294901760
        %763 = vmatpush1.msra.mxu0 %v762
        %v764 = vand.u32 %v212, 4294901760
        %v765 = vsub.f32 %v212, %v764
        %v766 = vand.u32 %v765, 4294901760
        %767 = vmatprep.subr.mxu0 %v766
        %v768 = vand.u32 %v211, 4294901760
        %v769 = vsub.f32 %v211, %v768
        %v770 = vand.u32 %v769, 4294901760
        %771 = vmatpush1.msra.mxu0 %v770
        %v772 = vand.u32 %v215, 4294901760
        %v773 = vsub.f32 %v215, %v772
        %v774 = vand.u32 %v773, 4294901760
        %775 = vmatprep.subr.mxu0 %v774
        %v776 = vand.u32 %v214, 4294901760
        %v777 = vsub.f32 %v214, %v776
        %v778 = vand.u32 %v777, 4294901760
        %779 = vmatpush1.msra.mxu0 %v778
        %v780 = vand.u32 %v218, 4294901760
        %v781 = vsub.f32 %v218, %v780
        %v782 = vand.u32 %v781, 4294901760
        %783 = vmatprep.subr.mxu0 %v782
        %v784 = vand.u32 %v217, 4294901760
        %v785 = vsub.f32 %v217, %v784
        %v786 = vand.u32 %v785, 4294901760
        %787 = vmatpush1.msra.mxu0 %v786
        %v788 = vand.u32 %v221, 4294901760
        %v789 = vsub.f32 %v221, %v788
        %v790 = vand.u32 %v789, 4294901760
        %791 = vmatprep.subr.mxu0 %v790
        %v792 = vand.u32 %v220, 4294901760
        %v793 = vsub.f32 %v220, %v792
        %v794 = vand.u32 %v793, 4294901760
        %795 = vmatpush1.msra.mxu0 %v794
        %v796 = vand.u32 %v224, 4294901760
        %v797 = vsub.f32 %v224, %v796
        %v798 = vand.u32 %v797, 4294901760
        %799 = vmatprep.subr.mxu0 %v798
        %v800 = vand.u32 %v223, 4294901760
        %v801 = vsub.f32 %v223, %v800
        %v802 = vand.u32 %v801, 4294901760
        %803 = vmatpush1.msra.mxu0 %v802
        %v804 = vand.u32 %v227, 4294901760
        %v805 = vsub.f32 %v227, %v804
        %v806 = vand.u32 %v805, 4294901760
        %807 = vmatprep.subr.mxu0 %v806
        %v808 = vand.u32 %v226, 4294901760
        %v809 = vsub.f32 %v226, %v808
        %v810 = vand.u32 %v809, 4294901760
        %811 = vmatpush1.msra.mxu0 %v810
        %812 = vmatprep.subr.mxu0 0.0
        %813 = vmatpush1.msra.mxu0 0.0
        %814 = vmatprep.subr.mxu0 0.0
        %815 = vmatpush1.msra.mxu0 0.0
        %816 = vmatprep.subr.mxu0 0.0
        %817 = vmatpush1.msra.mxu0 0.0
        %818 = vmatprep.subr.mxu0 0.0
        %819 = vmatpush1.msra.mxu0 0.0
        %820 = vmatprep.subr.mxu0 0.0
        %821 = vmatpush1.msra.mxu0 0.0
        %822 = vmatprep.subr.mxu0 0.0
        %823 = vmatpush1.msra.mxu0 0.0
        %824 = vmatprep.subr.mxu0 0.0
        %825 = vmatpush1.msra.mxu0 0.0
        %826 = vmatprep.subr.mxu0 0.0
        %827 = vmatpush1.msra.mxu0 0.0
        %828 = vmatprep.subr.mxu0 0.0
        %829 = vmatpush1.msra.mxu0 0.0
        %830 = vmatprep.subr.mxu0 0.0
        %831 = vmatpush1.msra.mxu0 0.0
        %832 = vmatprep.subr.mxu0 0.0
        %833 = vmatpush1.msra.mxu0 0.0
        %834 = vmatprep.subr.mxu0 0.0
        %835 = vmatpush1.msra.mxu0 0.0
        %836 = vmatprep.subr.mxu0 0.0
        %837 = vmatpush1.msra.mxu0 0.0
        %838 = vmatprep.subr.mxu0 0.0
        %839 = vmatpush1.msra.mxu0 0.0
        %840 = vmatprep.subr.mxu0 0.0
        %841 = vmatpush1.msra.mxu0 0.0
        %842 = vmatprep.subr.mxu0 0.0
        %843 = vmatpush1.msra.mxu0 0.0
        %844 = vmatprep.subr.mxu0 0.0
        %845 = vmatpush1.msra.mxu0 0.0
        %846 = vmatprep.subr.mxu0 0.0
        %847 = vmatpush1.msra.mxu0 0.0
        %848 = vmatprep.subr.mxu0 0.0
        %849 = vmatpush1.msra.mxu0 0.0
        %850 = vmatprep.subr.mxu0 0.0
        %851 = vmatpush1.msra.mxu0 0.0
        %852 = vmatprep.subr.mxu0 0.0
        %853 = vmatpush1.msra.mxu0 0.0
        %854 = vmatprep.subr.mxu0 0.0
        %855 = vmatpush1.msra.mxu0 0.0
        %856 = vmatprep.subr.mxu0 0.0
        %857 = vmatpush1.msra.mxu0 0.0
        %858 = vmatprep.subr.mxu0 0.0
        %859 = vmatpush1.msra.mxu0 0.0
        %860 = vmatprep.mubr.f32.mxu0 0.0
        %v861 = vand.u32 %v231, 4294901760
        %862 = vmatmul.mubr.f32.gmra.mrb[0].mxu0 %v861
        %v863 = vpop.f32.mrb[0].mxu0
        %v864 = vadd.f32 %v726, %v863
        %v865 = vpop.f32.mrb[0].mxu0
        %v866 = vadd.f32 %v728, %v865
        %867 = vmatprep.mubr.f32.mxu0 0.0
        %v868 = vand.u32 %v234, 4294901760
        %869 = vmatmul.mubr.f32.gmra.mrb[0].mxu0 %v868
        %v870 = vpop.f32.mrb[0].mxu0
        %v871 = vadd.f32 %v735, %v870
        %v872 = vpop.f32.mrb[0].mxu0
        %v873 = vadd.f32 %v737, %v872
        %874 = vmatprep.mubr.f32.mxu0 0.0
        %v875 = vand.u32 %v237, 4294901760
        %876 = vmatmul.mubr.f32.gmra.mrb[0].mxu0 %v875
        %v877 = vpop.f32.mrb[0].mxu0
        %v878 = vadd.f32 %v744, %v877
        %v879 = vpop.f32.mrb[0].mxu0
        %v880 = vadd.f32 %v746, %v879
        %881 = vdwg.mxu0
        %v882 = vand.u32 %v206, 4294901760
        %883 = vmatprep.subr.mxu0 %v882
        %v884 = vand.u32 %v205, 4294901760
        %885 = vmatpush1.msra.mxu0 %v884
        %v886 = vand.u32 %v209, 4294901760
        %887 = vmatprep.subr.mxu0 %v886
        %v888 = vand.u32 %v208, 4294901760
        %889 = vmatpush1.msra.mxu0 %v888
        %v890 = vand.u32 %v212, 4294901760
        %891 = vmatprep.subr.mxu0 %v890
        %v892 = vand.u32 %v211, 4294901760
        %893 = vmatpush1.msra.mxu0 %v892
        %v894 = vand.u32 %v215, 4294901760
        %895 = vmatprep.subr.mxu0 %v894
        %v896 = vand.u32 %v214, 4294901760
        %897 = vmatpush1.msra.mxu0 %v896
        %v898 = vand.u32 %v218, 4294901760
        %899 = vmatprep.subr.mxu0 %v898
        %v900 = vand.u32 %v217, 4294901760
        %901 = vmatpush1.msra.mxu0 %v900
        %v902 = vand.u32 %v221, 4294901760
        %903 = vmatprep.subr.mxu0 %v902
        %v904 = vand.u32 %v220, 4294901760
        %905 = vmatpush1.msra.mxu0 %v904
        %v906 = vand.u32 %v224, 4294901760
        %907 = vmatprep.subr.mxu0 %v906
        %v908 = vand.u32 %v223, 4294901760
        %909 = vmatpush1.msra.mxu0 %v908
        %v910 = vand.u32 %v227, 4294901760
        %911 = vmatprep.subr.mxu0 %v910
        %v912 = vand.u32 %v226, 4294901760
        %913 = vmatpush1.msra.mxu0 %v912
        %914 = vmatprep.subr.mxu0 0.0
        %915 = vmatpush1.msra.mxu0 0.0
        %916 = vmatprep.subr.mxu0 0.0
        %917 = vmatpush1.msra.mxu0 0.0
        %918 = vmatprep.subr.mxu0 0.0
        %919 = vmatpush1.msra.mxu0 0.0
        %920 = vmatprep.subr.mxu0 0.0
        %921 = vmatpush1.msra.mxu0 0.0
        %922 = vmatprep.subr.mxu0 0.0
        %923 = vmatpush1.msra.mxu0 0.0
        %924 = vmatprep.subr.mxu0 0.0
        %925 = vmatpush1.msra.mxu0 0.0
        %926 = vmatprep.subr.mxu0 0.0
        %927 = vmatpush1.msra.mxu0 0.0
        %928 = vmatprep.subr.mxu0 0.0
        %929 = vmatpush1.msra.mxu0 0.0
        %930 = vmatprep.subr.mxu0 0.0
        %931 = vmatpush1.msra.mxu0 0.0
        %932 = vmatprep.subr.mxu0 0.0
        %933 = vmatpush1.msra.mxu0 0.0
        %934 = vmatprep.subr.mxu0 0.0
        %935 = vmatpush1.msra.mxu0 0.0
        %936 = vmatprep.subr.mxu0 0.0
        %937 = vmatpush1.msra.mxu0 0.0
        %938 = vmatprep.subr.mxu0 0.0
        %939 = vmatpush1.msra.mxu0 0.0
        %940 = vmatprep.subr.mxu0 0.0
        %941 = vmatpush1.msra.mxu0 0.0
        %942 = vmatprep.subr.mxu0 0.0
        %943 = vmatpush1.msra.mxu0 0.0
        %944 = vmatprep.subr.mxu0 0.0
        %945 = vmatpush1.msra.mxu0 0.0
        %946 = vmatprep.subr.mxu0 0.0
        %947 = vmatpush1.msra.mxu0 0.0
        %948 = vmatprep.subr.mxu0 0.0
        %949 = vmatpush1.msra.mxu0 0.0
        %950 = vmatprep.subr.mxu0 0.0
        %951 = vmatpush1.msra.mxu0 0.0
        %952 = vmatprep.subr.mxu0 0.0
        %953 = vmatpush1.msra.mxu0 0.0
        %954 = vmatprep.subr.mxu0 0.0
        %955 = vmatpush1.msra.mxu0 0.0
        %956 = vmatprep.subr.mxu0 0.0
        %957 = vmatpush1.msra.mxu0 0.0
        %958 = vmatprep.subr.mxu0 0.0
        %959 = vmatpush1.msra.mxu0 0.0
        %960 = vmatprep.subr.mxu0 0.0
        %961 = vmatpush1.msra.mxu0 0.0
        %962 = vmatprep.mubr.f32.mxu0 0.0
        %v963 = vand.u32 %v231, 4294901760
        %964 = vmatmul.mubr.f32.gmra.mrb[0].mxu0 %v963
        %v965 = vpop.f32.mrb[0].mxu0
        %v966 = vadd.f32 %v864, %v965
        %v967 = vpop.f32.mrb[0].mxu0
        %v968 = vadd.f32 %v866, %v967
        %969 = vmatprep.mubr.f32.mxu0 0.0
        %v970 = vand.u32 %v234, 4294901760
        %971 = vmatmul.mubr.f32.gmra.mrb[0].mxu0 %v970
        %v972 = vpop.f32.mrb[0].mxu0
        %v973 = vadd.f32 %v871, %v972
        %v974 = vpop.f32.mrb[0].mxu0
        %v975 = vadd.f32 %v873, %v974
        %976 = vmatprep.mubr.f32.mxu0 0.0
        %v977 = vand.u32 %v237, 4294901760
        %978 = vmatmul.mubr.f32.gmra.mrb[0].mxu0 %v977
        %v979 = vpop.f32.mrb[0].mxu0
        %v980 = vadd.f32 %v878, %v979
        %v981 = vpop.f32.mrb[0].mxu0
        %v982 = vadd.f32 %v880, %v981
        %983 = vdwg.mxu0
        %984 = vmatprep.subr.mxu0 0.0
        %v985 = vand.u32 %v207, 4294901760
        %986 = vmatpush1.msra.mxu0 %v985
        %987 = vmatprep.subr.mxu0 0.0
        %v988 = vand.u32 %v210, 4294901760
        %989 = vmatpush1.msra.mxu0 %v988
        %990 = vmatprep.subr.mxu0 0.0
        %v991 = vand.u32 %v213, 4294901760
        %992 = vmatpush1.msra.mxu0 %v991
        %993 = vmatprep.subr.mxu0 0.0
        %v994 = vand.u32 %v216, 4294901760
        %995 = vmatpush1.msra.mxu0 %v994
        %996 = vmatprep.subr.mxu0 0.0
        %v997 = vand.u32 %v219, 4294901760
        %998 = vmatpush1.msra.mxu0 %v997
        %999 = vmatprep.subr.mxu0 0.0
        %v1000 = vand.u32 %v222, 4294901760
        %1001 = vmatpush1.msra.mxu0 %v1000
        %1002 = vmatprep.subr.mxu0 0.0
        %v1003 = vand.u32 %v225, 4294901760
        %1004 = vmatpush1.msra.mxu0 %v1003
        %1005 = vmatprep.subr.mxu0 0.0
        %v1006 = vand.u32 %v228, 4294901760
        %1007 = vmatpush1.msra.mxu0 %v1006
        %1008 = vmatprep.subr.mxu0 0.0
        %1009 = vmatpush1.msra.mxu0 0.0
        %1010 = vmatprep.subr.mxu0 0.0
        %1011 = vmatpush1.msra.mxu0 0.0
        %1012 = vmatprep.subr.mxu0 0.0
        %1013 = vmatpush1.msra.mxu0 0.0
        %1014 = vmatprep.subr.mxu0 0.0
        %1015 = vmatpush1.msra.mxu0 0.0
        %1016 = vmatprep.subr.mxu0 0.0
        %1017 = vmatpush1.msra.mxu0 0.0
        %1018 = vmatprep.subr.mxu0 0.0
        %1019 = vmatpush1.msra.mxu0 0.0
        %1020 = vmatprep.subr.mxu0 0.0
        %1021 = vmatpush1.msra.mxu0 0.0
        %1022 = vmatprep.subr.mxu0 0.0
        %1023 = vmatpush1.msra.mxu0 0.0
        %1024 = vmatprep.subr.mxu0 0.0
        %1025 = vmatpush1.msra.mxu0 0.0
        %1026 = vmatprep.subr.mxu0 0.0
        %1027 = vmatpush1.msra.mxu0 0.0
        %1028 = vmatprep.subr.mxu0 0.0
        %1029 = vmatpush1.msra.mxu0 0.0
        %1030 = vmatprep.subr.mxu0 0.0
        %1031 = vmatpush1.msra.mxu0 0.0
        %1032 = vmatprep.subr.mxu0 0.0
        %1033 = vmatpush1.msra.mxu0 0.0
        %1034 = vmatprep.subr.mxu0 0.0
        %1035 = vmatpush1.msra.mxu0 0.0
        %1036 = vmatprep.subr.mxu0 0.0
        %1037 = vmatpush1.msra.mxu0 0.0
        %1038 = vmatprep.subr.mxu0 0.0
        %1039 = vmatpush1.msra.mxu0 0.0
        %1040 = vmatprep.subr.mxu0 0.0
        %1041 = vmatpush1.msra.mxu0 0.0
        %1042 = vmatprep.subr.mxu0 0.0
        %1043 = vmatpush1.msra.mxu0 0.0
        %1044 = vmatprep.subr.mxu0 0.0
        %1045 = vmatpush1.msra.mxu0 0.0
        %1046 = vmatprep.subr.mxu0 0.0
        %1047 = vmatpush1.msra.mxu0 0.0
        %1048 = vmatprep.subr.mxu0 0.0
        %1049 = vmatpush1.msra.mxu0 0.0
        %1050 = vmatprep.subr.mxu0 0.0
        %1051 = vmatpush1.msra.mxu0 0.0
        %1052 = vmatprep.subr.mxu0 0.0
        %1053 = vmatpush1.msra.mxu0 0.0
        %1054 = vmatprep.subr.mxu0 0.0
        %1055 = vmatpush1.msra.mxu0 0.0
        %1056 = vmatprep.mubr.f32.mxu0 0.0
        %v1057 = vand.u32 %v231, 4294901760
        %v1058 = vsub.f32 %v231, %v1057
        %v1059 = vand.u32 %v1058, 4294901760
        %v1060 = vsub.f32 %v1058, %v1059
        %v1061 = vand.u32 %v1060, 4294901760
        %1062 = vmatmul.mubr.f32.gmra.mrb[0].mxu0 %v1061
        %v1063 = vpop.f32.mrb[0].mxu0
        %v1064 = vadd.f32 0.0, %v1063
        %v1065 = vpop.f32.mrb[0].mxu0
        %1066 = vmatprep.mubr.f32.mxu0 0.0
        %v1067 = vand.u32 %v234, 4294901760
        %v1068 = vsub.f32 %v234, %v1067
        %v1069 = vand.u32 %v1068, 4294901760
        %v1070 = vsub.f32 %v1068, %v1069
        %v1071 = vand.u32 %v1070, 4294901760
        %1072 = vmatmul.mubr.f32.gmra.mrb[0].mxu0 %v1071
        %v1073 = vpop.f32.mrb[0].mxu0
        %v1074 = vadd.f32 0.0, %v1073
        %v1075 = vpop.f32.mrb[0].mxu0
        %1076 = vmatprep.mubr.f32.mxu0 0.0
        %v1077 = vand.u32 %v237, 4294901760
        %v1078 = vsub.f32 %v237, %v1077
        %v1079 = vand.u32 %v1078, 4294901760
        %v1080 = vsub.f32 %v1078, %v1079
        %v1081 = vand.u32 %v1080, 4294901760
        %1082 = vmatmul.mubr.f32.gmra.mrb[0].mxu0 %v1081
        %v1083 = vpop.f32.mrb[0].mxu0
        %v1084 = vadd.f32 0.0, %v1083
        %v1085 = vpop.f32.mrb[0].mxu0
        %1086 = vdwg.mxu0
        %1087 = vmatprep.subr.mxu0 0.0
        %v1088 = vand.u32 %v207, 4294901760
        %v1089 = vsub.f32 %v207, %v1088
        %v1090 = vand.u32 %v1089, 4294901760
        %v1091 = vsub.f32 %v1089, %v1090
        %v1092 = vand.u32 %v1091, 4294901760
        %1093 = vmatpush1.msra.mxu0 %v1092
        %1094 = vmatprep.subr.mxu0 0.0
        %v1095 = vand.u32 %v210, 4294901760
        %v1096 = vsub.f32 %v210, %v1095
        %v1097 = vand.u32 %v1096, 4294901760
        %v1098 = vsub.f32 %v1096, %v1097
        %v1099 = vand.u32 %v1098, 4294901760
        %1100 = vmatpush1.msra.mxu0 %v1099
        %1101 = vmatprep.subr.mxu0 0.0
        %v1102 = vand.u32 %v213, 4294901760
        %v1103 = vsub.f32 %v213, %v1102
        %v1104 = vand.u32 %v1103, 4294901760
        %v1105 = vsub.f32 %v1103, %v1104
        %v1106 = vand.u32 %v1105, 4294901760
        %1107 = vmatpush1.msra.mxu0 %v1106
        %1108 = vmatprep.subr.mxu0 0.0
        %v1109 = vand.u32 %v216, 4294901760
        %v1110 = vsub.f32 %v216, %v1109
        %v1111 = vand.u32 %v1110, 4294901760
        %v1112 = vsub.f32 %v1110, %v1111
        %v1113 = vand.u32 %v1112, 4294901760
        %1114 = vmatpush1.msra.mxu0 %v1113
        %1115 = vmatprep.subr.mxu0 0.0
        %v1116 = vand.u32 %v219, 4294901760
        %v1117 = vsub.f32 %v219, %v1116
        %v1118 = vand.u32 %v1117, 4294901760
        %v1119 = vsub.f32 %v1117, %v1118
        %v1120 = vand.u32 %v1119, 4294901760
        %1121 = vmatpush1.msra.mxu0 %v1120
        %1122 = vmatprep.subr.mxu0 0.0
        %v1123 = vand.u32 %v222, 4294901760
        %v1124 = vsub.f32 %v222, %v1123
        %v1125 = vand.u32 %v1124, 4294901760
        %v1126 = vsub.f32 %v1124, %v1125
        %v1127 = vand.u32 %v1126, 4294901760
        %1128 = vmatpush1.msra.mxu0 %v1127
        %1129 = vmatprep.subr.mxu0 0.0
        %v1130 = vand.u32 %v225, 4294901760
        %v1131 = vsub.f32 %v225, %v1130
        %v1132 = vand.u32 %v1131, 4294901760
        %v1133 = vsub.f32 %v1131, %v1132
        %v1134 = vand.u32 %v1133, 4294901760
        %1135 = vmatpush1.msra.mxu0 %v1134
        %1136 = vmatprep.subr.mxu0 0.0
        %v1137 = vand.u32 %v228, 4294901760
        %v1138 = vsub.f32 %v228, %v1137
        %v1139 = vand.u32 %v1138, 4294901760
        %v1140 = vsub.f32 %v1138, %v1139
        %v1141 = vand.u32 %v1140, 4294901760
        %1142 = vmatpush1.msra.mxu0 %v1141
        %1143 = vmatprep.subr.mxu0 0.0
        %1144 = vmatpush1.msra.mxu0 0.0
        %1145 = vmatprep.subr.mxu0 0.0
        %1146 = vmatpush1.msra.mxu0 0.0
        %1147 = vmatprep.subr.mxu0 0.0
        %1148 = vmatpush1.msra.mxu0 0.0
        %1149 = vmatprep.subr.mxu0 0.0
        %1150 = vmatpush1.msra.mxu0 0.0
        %1151 = vmatprep.subr.mxu0 0.0
        %1152 = vmatpush1.msra.mxu0 0.0
        %1153 = vmatprep.subr.mxu0 0.0
        %1154 = vmatpush1.msra.mxu0 0.0
        %1155 = vmatprep.subr.mxu0 0.0
        %1156 = vmatpush1.msra.mxu0 0.0
        %1157 = vmatprep.subr.mxu0 0.0
        %1158 = vmatpush1.msra.mxu0 0.0
        %1159 = vmatprep.subr.mxu0 0.0
        %1160 = vmatpush1.msra.mxu0 0.0
        %1161 = vmatprep.subr.mxu0 0.0
        %1162 = vmatpush1.msra.mxu0 0.0
        %1163 = vmatprep.subr.mxu0 0.0
        %1164 = vmatpush1.msra.mxu0 0.0
        %1165 = vmatprep.subr.mxu0 0.0
        %1166 = vmatpush1.msra.mxu0 0.0
        %1167 = vmatprep.subr.mxu0 0.0
        %1168 = vmatpush1.msra.mxu0 0.0
        %1169 = vmatprep.subr.mxu0 0.0
        %1170 = vmatpush1.msra.mxu0 0.0
        %1171 = vmatprep.subr.mxu0 0.0
        %1172 = vmatpush1.msra.mxu0 0.0
        %1173 = vmatprep.subr.mxu0 0.0
        %1174 = vmatpush1.msra.mxu0 0.0
        %1175 = vmatprep.subr.mxu0 0.0
        %1176 = vmatpush1.msra.mxu0 0.0
        %1177 = vmatprep.subr.mxu0 0.0
        %1178 = vmatpush1.msra.mxu0 0.0
        %1179 = vmatprep.subr.mxu0 0.0
        %1180 = vmatpush1.msra.mxu0 0.0
        %1181 = vmatprep.subr.mxu0 0.0
        %1182 = vmatpush1.msra.mxu0 0.0
        %1183 = vmatprep.subr.mxu0 0.0
        %1184 = vmatpush1.msra.mxu0 0.0
        %1185 = vmatprep.subr.mxu0 0.0
        %1186 = vmatpush1.msra.mxu0 0.0
        %1187 = vmatprep.subr.mxu0 0.0
        %1188 = vmatpush1.msra.mxu0 0.0
        %1189 = vmatprep.subr.mxu0 0.0
        %1190 = vmatpush1.msra.mxu0 0.0
        %1191 = vmatprep.mubr.f32.mxu0 0.0
        %v1192 = vand.u32 %v231, 4294901760
        %1193 = vmatmul.mubr.f32.gmra.mrb[0].mxu0 %v1192
        %v1194 = vpop.f32.mrb[0].mxu0
        %v1195 = vadd.f32 %v1064, %v1194
        %v1196 = vpop.f32.mrb[0].mxu0
        %1197 = vmatprep.mubr.f32.mxu0 0.0
        %v1198 = vand.u32 %v234, 4294901760
        %1199 = vmatmul.mubr.f32.gmra.mrb[0].mxu0 %v1198
        %v1200 = vpop.f32.mrb[0].mxu0
        %v1201 = vadd.f32 %v1074, %v1200
        %v1202 = vpop.f32.mrb[0].mxu0
        %1203 = vmatprep.mubr.f32.mxu0 0.0
        %v1204 = vand.u32 %v237, 4294901760
        %1205 = vmatmul.mubr.f32.gmra.mrb[0].mxu0 %v1204
        %v1206 = vpop.f32.mrb[0].mxu0
        %v1207 = vadd.f32 %v1084, %v1206
        %v1208 = vpop.f32.mrb[0].mxu0
        %1209 = vdwg.mxu0
        %1210 = vmatprep.subr.mxu0 0.0
        %v1211 = vand.u32 %v207, 4294901760
        %v1212 = vsub.f32 %v207, %v1211
        %1213 = vmatpush1.msra.mxu0 %v1212
        %1214 = vmatprep.subr.mxu0 0.0
        %v1215 = vand.u32 %v210, 4294901760
        %v1216 = vsub.f32 %v210, %v1215
        %1217 = vmatpush1.msra.mxu0 %v1216
        %1218 = vmatprep.subr.mxu0 0.0
        %v1219 = vand.u32 %v213, 4294901760
        %v1220 = vsub.f32 %v213, %v1219
        %1221 = vmatpush1.msra.mxu0 %v1220
        %1222 = vmatprep.subr.mxu0 0.0
        %v1223 = vand.u32 %v216, 4294901760
        %v1224 = vsub.f32 %v216, %v1223
        %1225 = vmatpush1.msra.mxu0 %v1224
        %1226 = vmatprep.subr.mxu0 0.0
        %v1227 = vand.u32 %v219, 4294901760
        %v1228 = vsub.f32 %v219, %v1227
        %1229 = vmatpush1.msra.mxu0 %v1228
        %1230 = vmatprep.subr.mxu0 0.0
        %v1231 = vand.u32 %v222, 4294901760
        %v1232 = vsub.f32 %v222, %v1231
        %1233 = vmatpush1.msra.mxu0 %v1232
        %1234 = vmatprep.subr.mxu0 0.0
        %v1235 = vand.u32 %v225, 4294901760
        %v1236 = vsub.f32 %v225, %v1235
        %1237 = vmatpush1.msra.mxu0 %v1236
        %1238 = vmatprep.subr.mxu0 0.0
        %v1239 = vand.u32 %v228, 4294901760
        %v1240 = vsub.f32 %v228, %v1239
        %1241 = vmatpush1.msra.mxu0 %v1240
        %1242 = vmatprep.subr.mxu0 0.0
        %1243 = vmatpush1.msra.mxu0 0.0
        %1244 = vmatprep.subr.mxu0 0.0
        %1245 = vmatpush1.msra.mxu0 0.0
        %1246 = vmatprep.subr.mxu0 0.0
        %1247 = vmatpush1.msra.mxu0 0.0
        %1248 = vmatprep.subr.mxu0 0.0
        %1249 = vmatpush1.msra.mxu0 0.0
        %1250 = vmatprep.subr.mxu0 0.0
        %1251 = vmatpush1.msra.mxu0 0.0
        %1252 = vmatprep.subr.mxu0 0.0
        %1253 = vmatpush1.msra.mxu0 0.0
        %1254 = vmatprep.subr.mxu0 0.0
        %1255 = vmatpush1.msra.mxu0 0.0
        %1256 = vmatprep.subr.mxu0 0.0
        %1257 = vmatpush1.msra.mxu0 0.0
        %1258 = vmatprep.subr.mxu0 0.0
        %1259 = vmatpush1.msra.mxu0 0.0
        %1260 = vmatprep.subr.mxu0 0.0
        %1261 = vmatpush1.msra.mxu0 0.0
        %1262 = vmatprep.subr.mxu0 0.0
        %1263 = vmatpush1.msra.mxu0 0.0
        %1264 = vmatprep.subr.mxu0 0.0
        %1265 = vmatpush1.msra.mxu0 0.0
        %1266 = vmatprep.subr.mxu0 0.0
        %1267 = vmatpush1.msra.mxu0 0.0
        %1268 = vmatprep.subr.mxu0 0.0
        %1269 = vmatpush1.msra.mxu0 0.0
        %1270 = vmatprep.subr.mxu0 0.0
        %1271 = vmatpush1.msra.mxu0 0.0
        %1272 = vmatprep.subr.mxu0 0.0
        %1273 = vmatpush1.msra.mxu0 0.0
        %1274 = vmatprep.subr.mxu0 0.0
        %1275 = vmatpush1.msra.mxu0 0.0
        %1276 = vmatprep.subr.mxu0 0.0
        %1277 = vmatpush1.msra.mxu0 0.0
        %1278 = vmatprep.subr.mxu0 0.0
        %1279 = vmatpush1.msra.mxu0 0.0
        %1280 = vmatprep.subr.mxu0 0.0
        %1281 = vmatpush1.msra.mxu0 0.0
        %1282 = vmatprep.subr.mxu0 0.0
        %1283 = vmatpush1.msra.mxu0 0.0
        %1284 = vmatprep.subr.mxu0 0.0
        %1285 = vmatpush1.msra.mxu0 0.0
        %1286 = vmatprep.subr.mxu0 0.0
        %1287 = vmatpush1.msra.mxu0 0.0
        %1288 = vmatprep.subr.mxu0 0.0
        %1289 = vmatpush1.msra.mxu0 0.0
        %1290 = vmatprep.mubr.f32.mxu0 0.0
        %v1291 = vand.u32 %v231, 4294901760
        %v1292 = vsub.f32 %v231, %v1291
        %1293 = vmatmul.mubr.f32.gmra.mrb[0].mxu0 %v1292
        %v1294 = vpop.f32.mrb[0].mxu0
        %v1295 = vadd.f32 %v1195, %v1294
        %v1296 = vpop.f32.mrb[0].mxu0
        %1297 = vmatprep.mubr.f32.mxu0 0.0
        %v1298 = vand.u32 %v234, 4294901760
        %v1299 = vsub.f32 %v234, %v1298
        %1300 = vmatmul.mubr.f32.gmra.mrb[0].mxu0 %v1299
        %v1301 = vpop.f32.mrb[0].mxu0
        %v1302 = vadd.f32 %v1201, %v1301
        %v1303 = vpop.f32.mrb[0].mxu0
        %1304 = vmatprep.mubr.f32.mxu0 0.0
        %v1305 = vand.u32 %v237, 4294901760
        %v1306 = vsub.f32 %v237, %v1305
        %1307 = vmatmul.mubr.f32.gmra.mrb[0].mxu0 %v1306
        %v1308 = vpop.f32.mrb[0].mxu0
        %v1309 = vadd.f32 %v1207, %v1308
        %v1310 = vpop.f32.mrb[0].mxu0
        %1311 = vdwg.mxu0
        %1312 = vmatprep.subr.mxu0 0.0
        %v1313 = vand.u32 %v207, 4294901760
        %1314 = vmatpush1.msra.mxu0 %v1313
        %1315 = vmatprep.subr.mxu0 0.0
        %v1316 = vand.u32 %v210, 4294901760
        %1317 = vmatpush1.msra.mxu0 %v1316
        %1318 = vmatprep.subr.mxu0 0.0
        %v1319 = vand.u32 %v213, 4294901760
        %1320 = vmatpush1.msra.mxu0 %v1319
        %1321 = vmatprep.subr.mxu0 0.0
        %v1322 = vand.u32 %v216, 4294901760
        %1323 = vmatpush1.msra.mxu0 %v1322
        %1324 = vmatprep.subr.mxu0 0.0
        %v1325 = vand.u32 %v219, 4294901760
        %1326 = vmatpush1.msra.mxu0 %v1325
        %1327 = vmatprep.subr.mxu0 0.0
        %v1328 = vand.u32 %v222, 4294901760
        %1329 = vmatpush1.msra.mxu0 %v1328
        %1330 = vmatprep.subr.mxu0 0.0
        %v1331 = vand.u32 %v225, 4294901760
        %1332 = vmatpush1.msra.mxu0 %v1331
        %1333 = vmatprep.subr.mxu0 0.0
        %v1334 = vand.u32 %v228, 4294901760
        %1335 = vmatpush1.msra.mxu0 %v1334
        %1336 = vmatprep.subr.mxu0 0.0
        %1337 = vmatpush1.msra.mxu0 0.0
        %1338 = vmatprep.subr.mxu0 0.0
        %1339 = vmatpush1.msra.mxu0 0.0
        %1340 = vmatprep.subr.mxu0 0.0
        %1341 = vmatpush1.msra.mxu0 0.0
        %1342 = vmatprep.subr.mxu0 0.0
        %1343 = vmatpush1.msra.mxu0 0.0
        %1344 = vmatprep.subr.mxu0 0.0
        %1345 = vmatpush1.msra.mxu0 0.0
        %1346 = vmatprep.subr.mxu0 0.0
        %1347 = vmatpush1.msra.mxu0 0.0
        %1348 = vmatprep.subr.mxu0 0.0
        %1349 = vmatpush1.msra.mxu0 0.0
        %1350 = vmatprep.subr.mxu0 0.0
        %1351 = vmatpush1.msra.mxu0 0.0
        %1352 = vmatprep.subr.mxu0 0.0
        %1353 = vmatpush1.msra.mxu0 0.0
        %1354 = vmatprep.subr.mxu0 0.0
        %1355 = vmatpush1.msra.mxu0 0.0
        %1356 = vmatprep.subr.mxu0 0.0
        %1357 = vmatpush1.msra.mxu0 0.0
        %1358 = vmatprep.subr.mxu0 0.0
        %1359 = vmatpush1.msra.mxu0 0.0
        %1360 = vmatprep.subr.mxu0 0.0
        %1361 = vmatpush1.msra.mxu0 0.0
        %1362 = vmatprep.subr.mxu0 0.0
        %1363 = vmatpush1.msra.mxu0 0.0
        %1364 = vmatprep.subr.mxu0 0.0
        %1365 = vmatpush1.msra.mxu0 0.0
        %1366 = vmatprep.subr.mxu0 0.0
        %1367 = vmatpush1.msra.mxu0 0.0
        %1368 = vmatprep.subr.mxu0 0.0
        %1369 = vmatpush1.msra.mxu0 0.0
        %1370 = vmatprep.subr.mxu0 0.0
        %1371 = vmatpush1.msra.mxu0 0.0
        %1372 = vmatprep.subr.mxu0 0.0
        %1373 = vmatpush1.msra.mxu0 0.0
        %1374 = vmatprep.subr.mxu0 0.0
        %1375 = vmatpush1.msra.mxu0 0.0
        %1376 = vmatprep.subr.mxu0 0.0
        %1377 = vmatpush1.msra.mxu0 0.0
        %1378 = vmatprep.subr.mxu0 0.0
        %1379 = vmatpush1.msra.mxu0 0.0
        %1380 = vmatprep.subr.mxu0 0.0
        %1381 = vmatpush1.msra.mxu0 0.0
        %1382 = vmatprep.subr.mxu0 0.0
        %1383 = vmatpush1.msra.mxu0 0.0
        %1384 = vmatprep.mubr.f32.mxu0 0.0
        %v1385 = vand.u32 %v231, 4294901760
        %v1386 = vsub.f32 %v231, %v1385
        %v1387 = vand.u32 %v1386, 4294901760
        %1388 = vmatmul.mubr.f32.gmra.mrb[0].mxu0 %v1387
        %v1389 = vpop.f32.mrb[0].mxu0
        %v1390 = vadd.f32 %v1295, %v1389
        %v1391 = vpop.f32.mrb[0].mxu0
        %1392 = vmatprep.mubr.f32.mxu0 0.0
        %v1393 = vand.u32 %v234, 4294901760
        %v1394 = vsub.f32 %v234, %v1393
        %v1395 = vand.u32 %v1394, 4294901760
        %1396 = vmatmul.mubr.f32.gmra.mrb[0].mxu0 %v1395
        %v1397 = vpop.f32.mrb[0].mxu0
        %v1398 = vadd.f32 %v1302, %v1397
        %v1399 = vpop.f32.mrb[0].mxu0
        %1400 = vmatprep.mubr.f32.mxu0 0.0
        %v1401 = vand.u32 %v237, 4294901760
        %v1402 = vsub.f32 %v237, %v1401
        %v1403 = vand.u32 %v1402, 4294901760
        %1404 = vmatmul.mubr.f32.gmra.mrb[0].mxu0 %v1403
        %v1405 = vpop.f32.mrb[0].mxu0
        %v1406 = vadd.f32 %v1309, %v1405
        %v1407 = vpop.f32.mrb[0].mxu0
        %1408 = vdwg.mxu0
        %1409 = vmatprep.subr.mxu0 0.0
        %v1410 = vand.u32 %v207, 4294901760
        %v1411 = vsub.f32 %v207, %v1410
        %v1412 = vand.u32 %v1411, 4294901760
        %1413 = vmatpush1.msra.mxu0 %v1412
        %1414 = vmatprep.subr.mxu0 0.0
        %v1415 = vand.u32 %v210, 4294901760
        %v1416 = vsub.f32 %v210, %v1415
        %v1417 = vand.u32 %v1416, 4294901760
        %1418 = vmatpush1.msra.mxu0 %v1417
        %1419 = vmatprep.subr.mxu0 0.0
        %v1420 = vand.u32 %v213, 4294901760
        %v1421 = vsub.f32 %v213, %v1420
        %v1422 = vand.u32 %v1421, 4294901760
        %1423 = vmatpush1.msra.mxu0 %v1422
        %1424 = vmatprep.subr.mxu0 0.0
        %v1425 = vand.u32 %v216, 4294901760
        %v1426 = vsub.f32 %v216, %v1425
        %v1427 = vand.u32 %v1426, 4294901760
        %1428 = vmatpush1.msra.mxu0 %v1427
        %1429 = vmatprep.subr.mxu0 0.0
        %v1430 = vand.u32 %v219, 4294901760
        %v1431 = vsub.f32 %v219, %v1430
        %v1432 = vand.u32 %v1431, 4294901760
        %1433 = vmatpush1.msra.mxu0 %v1432
        %1434 = vmatprep.subr.mxu0 0.0
        %v1435 = vand.u32 %v222, 4294901760
        %v1436 = vsub.f32 %v222, %v1435
        %v1437 = vand.u32 %v1436, 4294901760
        %1438 = vmatpush1.msra.mxu0 %v1437
        %1439 = vmatprep.subr.mxu0 0.0
        %v1440 = vand.u32 %v225, 4294901760
        %v1441 = vsub.f32 %v225, %v1440
        %v1442 = vand.u32 %v1441, 4294901760
        %1443 = vmatpush1.msra.mxu0 %v1442
        %1444 = vmatprep.subr.mxu0 0.0
        %v1445 = vand.u32 %v228, 4294901760
        %v1446 = vsub.f32 %v228, %v1445
        %v1447 = vand.u32 %v1446, 4294901760
        %1448 = vmatpush1.msra.mxu0 %v1447
        %1449 = vmatprep.subr.mxu0 0.0
        %1450 = vmatpush1.msra.mxu0 0.0
        %1451 = vmatprep.subr.mxu0 0.0
        %1452 = vmatpush1.msra.mxu0 0.0
        %1453 = vmatprep.subr.mxu0 0.0
        %1454 = vmatpush1.msra.mxu0 0.0
        %1455 = vmatprep.subr.mxu0 0.0
        %1456 = vmatpush1.msra.mxu0 0.0
        %1457 = vmatprep.subr.mxu0 0.0
        %1458 = vmatpush1.msra.mxu0 0.0
        %1459 = vmatprep.subr.mxu0 0.0
        %1460 = vmatpush1.msra.mxu0 0.0
        %1461 = vmatprep.subr.mxu0 0.0
        %1462 = vmatpush1.msra.mxu0 0.0
        %1463 = vmatprep.subr.mxu0 0.0
        %1464 = vmatpush1.msra.mxu0 0.0
        %1465 = vmatprep.subr.mxu0 0.0
        %1466 = vmatpush1.msra.mxu0 0.0
        %1467 = vmatprep.subr.mxu0 0.0
        %1468 = vmatpush1.msra.mxu0 0.0
        %1469 = vmatprep.subr.mxu0 0.0
        %1470 = vmatpush1.msra.mxu0 0.0
        %1471 = vmatprep.subr.mxu0 0.0
        %1472 = vmatpush1.msra.mxu0 0.0
        %1473 = vmatprep.subr.mxu0 0.0
        %1474 = vmatpush1.msra.mxu0 0.0
        %1475 = vmatprep.subr.mxu0 0.0
        %1476 = vmatpush1.msra.mxu0 0.0
        %1477 = vmatprep.subr.mxu0 0.0
        %1478 = vmatpush1.msra.mxu0 0.0
        %1479 = vmatprep.subr.mxu0 0.0
        %1480 = vmatpush1.msra.mxu0 0.0
        %1481 = vmatprep.subr.mxu0 0.0
        %1482 = vmatpush1.msra.mxu0 0.0
        %1483 = vmatprep.subr.mxu0 0.0
        %1484 = vmatpush1.msra.mxu0 0.0
        %1485 = vmatprep.subr.mxu0 0.0
        %1486 = vmatpush1.msra.mxu0 0.0
        %1487 = vmatprep.subr.mxu0 0.0
        %1488 = vmatpush1.msra.mxu0 0.0
        %1489 = vmatprep.subr.mxu0 0.0
        %1490 = vmatpush1.msra.mxu0 0.0
        %1491 = vmatprep.subr.mxu0 0.0
        %1492 = vmatpush1.msra.mxu0 0.0
        %1493 = vmatprep.subr.mxu0 0.0
        %1494 = vmatpush1.msra.mxu0 0.0
        %1495 = vmatprep.subr.mxu0 0.0
        %1496 = vmatpush1.msra.mxu0 0.0
        %1497 = vmatprep.mubr.f32.mxu0 0.0
        %v1498 = vand.u32 %v231, 4294901760
        %1499 = vmatmul.mubr.f32.gmra.mrb[0].mxu0 %v1498
        %v1500 = vpop.f32.mrb[0].mxu0
        %v1501 = vadd.f32 %v1390, %v1500
        %v1502 = vpop.f32.mrb[0].mxu0
        %1503 = vmatprep.mubr.f32.mxu0 0.0
        %v1504 = vand.u32 %v234, 4294901760
        %1505 = vmatmul.mubr.f32.gmra.mrb[0].mxu0 %v1504
        %v1506 = vpop.f32.mrb[0].mxu0
        %v1507 = vadd.f32 %v1398, %v1506
        %v1508 = vpop.f32.mrb[0].mxu0
        %1509 = vmatprep.mubr.f32.mxu0 0.0
        %v1510 = vand.u32 %v237, 4294901760
        %1511 = vmatmul.mubr.f32.gmra.mrb[0].mxu0 %v1510
        %v1512 = vpop.f32.mrb[0].mxu0
        %v1513 = vadd.f32 %v1406, %v1512
        %v1514 = vpop.f32.mrb[0].mxu0
        %1515 = vdwg.mxu0
        %1516 = vmatprep.subr.mxu0 0.0
        %v1517 = vand.u32 %v207, 4294901760
        %1518 = vmatpush1.msra.mxu0 %v1517
        %1519 = vmatprep.subr.mxu0 0.0
        %v1520 = vand.u32 %v210, 4294901760
        %1521 = vmatpush1.msra.mxu0 %v1520
        %1522 = vmatprep.subr.mxu0 0.0
        %v1523 = vand.u32 %v213, 4294901760
        %1524 = vmatpush1.msra.mxu0 %v1523
        %1525 = vmatprep.subr.mxu0 0.0
        %v1526 = vand.u32 %v216, 4294901760
        %1527 = vmatpush1.msra.mxu0 %v1526
        %1528 = vmatprep.subr.mxu0 0.0
        %v1529 = vand.u32 %v219, 4294901760
        %1530 = vmatpush1.msra.mxu0 %v1529
        %1531 = vmatprep.subr.mxu0 0.0
        %v1532 = vand.u32 %v222, 4294901760
        %1533 = vmatpush1.msra.mxu0 %v1532
        %1534 = vmatprep.subr.mxu0 0.0
        %v1535 = vand.u32 %v225, 4294901760
        %1536 = vmatpush1.msra.mxu0 %v1535
        %1537 = vmatprep.subr.mxu0 0.0
        %v1538 = vand.u32 %v228, 4294901760
        %1539 = vmatpush1.msra.mxu0 %v1538
        %1540 = vmatprep.subr.mxu0 0.0
        %1541 = vmatpush1.msra.mxu0 0.0
        %1542 = vmatprep.subr.mxu0 0.0
        %1543 = vmatpush1.msra.mxu0 0.0
        %1544 = vmatprep.subr.mxu0 0.0
        %1545 = vmatpush1.msra.mxu0 0.0
        %1546 = vmatprep.subr.mxu0 0.0
        %1547 = vmatpush1.msra.mxu0 0.0
        %1548 = vmatprep.subr.mxu0 0.0
        %1549 = vmatpush1.msra.mxu0 0.0
        %1550 = vmatprep.subr.mxu0 0.0
        %1551 = vmatpush1.msra.mxu0 0.0
        %1552 = vmatprep.subr.mxu0 0.0
        %1553 = vmatpush1.msra.mxu0 0.0
        %1554 = vmatprep.subr.mxu0 0.0
        %1555 = vmatpush1.msra.mxu0 0.0
        %1556 = vmatprep.subr.mxu0 0.0
        %1557 = vmatpush1.msra.mxu0 0.0
        %1558 = vmatprep.subr.mxu0 0.0
        %1559 = vmatpush1.msra.mxu0 0.0
        %1560 = vmatprep.subr.mxu0 0.0
        %1561 = vmatpush1.msra.mxu0 0.0
        %1562 = vmatprep.subr.mxu0 0.0
        %1563 = vmatpush1.msra.mxu0 0.0
        %1564 = vmatprep.subr.mxu0 0.0
        %1565 = vmatpush1.msra.mxu0 0.0
        %1566 = vmatprep.subr.mxu0 0.0
        %1567 = vmatpush1.msra.mxu0 0.0
        %1568 = vmatprep.subr.mxu0 0.0
        %1569 = vmatpush1.msra.mxu0 0.0
        %1570 = vmatprep.subr.mxu0 0.0
        %1571 = vmatpush1.msra.mxu0 0.0
        %1572 = vmatprep.subr.mxu0 0.0
        %1573 = vmatpush1.msra.mxu0 0.0
        %1574 = vmatprep.subr.mxu0 0.0
        %1575 = vmatpush1.msra.mxu0 0.0
        %1576 = vmatprep.subr.mxu0 0.0
        %1577 = vmatpush1.msra.mxu0 0.0
        %1578 = vmatprep.subr.mxu0 0.0
        %1579 = vmatpush1.msra.mxu0 0.0
        %1580 = vmatprep.subr.mxu0 0.0
        %1581 = vmatpush1.msra.mxu0 0.0
        %1582 = vmatprep.subr.mxu0 0.0
        %1583 = vmatpush1.msra.mxu0 0.0
        %1584 = vmatprep.subr.mxu0 0.0
        %1585 = vmatpush1.msra.mxu0 0.0
        %1586 = vmatprep.subr.mxu0 0.0
        %1587 = vmatpush1.msra.mxu0 0.0
        %1588 = vmatprep.mubr.f32.mxu0 0.0
        %v1589 = vand.u32 %v231, 4294901760
        %1590 = vmatmul.mubr.f32.gmra.mrb[0].mxu0 %v1589
        %v1591 = vpop.f32.mrb[0].mxu0
        %v1592 = vadd.f32 %v1501, %v1591
        %v1593 = vpop.f32.mrb[0].mxu0
        %1594 = vmatprep.mubr.f32.mxu0 0.0
        %v1595 = vand.u32 %v234, 4294901760
        %1596 = vmatmul.mubr.f32.gmra.mrb[0].mxu0 %v1595
        %v1597 = vpop.f32.mrb[0].mxu0
        %v1598 = vadd.f32 %v1507, %v1597
        %v1599 = vpop.f32.mrb[0].mxu0
        %1600 = vmatprep.mubr.f32.mxu0 0.0
        %v1601 = vand.u32 %v237, 4294901760
        %1602 = vmatmul.mubr.f32.gmra.mrb[0].mxu0 %v1601
        %v1603 = vpop.f32.mrb[0].mxu0
        %v1604 = vadd.f32 %v1513, %v1603
        %v1605 = vpop.f32.mrb[0].mxu0
        %1606 = vdwg.mxu0
        %v1607 = vsub.f32 0.0, %v968
        %v1608 = vsub.f32 0.0, %v975
        %v1609 = vsub.f32 0.0, %v982
        %v1610 = vmul.f32 %v966, %v966
        %v1611 = vmul.f32 %v973, %v973
        %v1612 = vmul.f32 %v980, %v980
        %v1613 = vmul.f32 %v1607, %v1607
        %v1614 = vmul.f32 %v1608, %v1608
        %v1615 = vmul.f32 %v1609, %v1609
        %v1616 = vadd.f32 %v1610, %v1613
        %v1617 = vadd.f32 %v1611, %v1614
        %v1618 = vadd.f32 %v1612, %v1615
        %v1619 = vrsqrt.pop %v1616
        %v1620 = vmul.f32 %v1616, %v1619
        %vm1621 = vcmp.eq.f32.partialorder %v1616, inf
        %v1622 = vsel %vm1621, %v1616, %v1620
        %vm1623 = vcmp.eq.f32.partialorder %v1616, 0.0
        %v1624 = vand.u32 %v1616, 2147483648
        %v1625 = vsel %vm1623, %v1624, %v1622
        %v1626 = vrsqrt.pop %v1617
        %v1627 = vmul.f32 %v1617, %v1626
        %vm1628 = vcmp.eq.f32.partialorder %v1617, inf
        %v1629 = vsel %vm1628, %v1617, %v1627
        %vm1630 = vcmp.eq.f32.partialorder %v1617, 0.0
        %v1631 = vand.u32 %v1617, 2147483648
        %v1632 = vsel %vm1630, %v1631, %v1629
        %v1633 = vrsqrt.pop %v1618
        %v1634 = vmul.f32 %v1618, %v1633
        %vm1635 = vcmp.eq.f32.partialorder %v1618, inf
        %v1636 = vsel %vm1635, %v1618, %v1634
        %vm1637 = vcmp.eq.f32.partialorder %v1618, 0.0
        %v1638 = vand.u32 %v1618, 2147483648
        %v1639 = vsel %vm1637, %v1638, %v1636
        %v1640 = vadd.f32 %v966, 1e-15
        %v1641 = vadd.f32 %v973, 1e-15
        %v1642 = vadd.f32 %v980, 1e-15
        %v1643 = vand.u32 2147483647, %v1640
        %v1644 = vand.u32 2147483647, %v1607
        %v1645 = vmin.f32 %v1643, %v1644
        %v1646 = vmax.f32 %v1643, %v1644
        %v1647 = vrcp.pop %v1646
        %v1648 = vmul.f32 %v1645, %v1647
        %v1649 = vmul.f32 %v1648, %v1648
        %v1650 = vmul.f32 0.002785687, %v1649
        %v1651 = vadd.f32 %v1650, -0.015866
        %v1652 = vmul.f32 %v1651, %v1649
        %v1653 = vadd.f32 %v1652, 0.04247222
        %v1654 = vmul.f32 %v1653, %v1649
        %v1655 = vadd.f32 %v1654, -0.074975304
        %v1656 = vmul.f32 %v1655, %v1649
        %v1657 = vadd.f32 %v1656, 0.1064488
        %v1658 = vmul.f32 %v1657, %v1649
        %v1659 = vadd.f32 %v1658, -0.14207031
        %v1660 = vmul.f32 %v1659, %v1649
        %v1661 = vadd.f32 %v1660, 0.19993454
        %v1662 = vmul.f32 %v1661, %v1649
        %v1663 = vadd.f32 %v1662, -0.33333147
        %v1664 = vmul.f32 %v1663, %v1649
        %v1665 = vmul.f32 %v1664, %v1648
        %v1666 = vadd.f32 %v1665, %v1648
        %vm1667 = vcmp.gt.f32.partialorder %v1644, %v1643
        %v1668 = vsub.f32 1.5707964, %v1666
        %v1669 = vsel %vm1667, %v1668, %v1666
        %vm1670 = vcmp.lt.f32.partialorder %v1640, 0.0
        %v1671 = vsub.f32 3.1415927, %v1669
        %v1672 = vsel %vm1670, %v1671, %v1669
        %vm1673 = vcmp.lt.s32.totalorder %v1640, 0
        %v1674 = vsel %vm1673, 3.1415927, 0.0
        %vm1675 = vcmp.eq.f32.partialorder %v1607, 0.0
        %v1676 = vsel %vm1675, %v1674, %v1672
        %vm1677 = vcmp.ne.f32.partialorder %v1640, %v1640
        %vm1678 = vcmp.ne.f32.partialorder %v1607, %v1607
        %vm1679 = vmor %vm1677, %vm1678
        %v1680 = vsel %vm1679, nan, %v1676
        %vm1681 = vcmp.lt.f32.partialorder %v1640, 0.0
        %v1682 = vsel %vm1681, 2.3561945, 0.7853982
        %vm1683 = vcmp.eq.s32.totalorder %v1643, inf
        %vm1684 = vcmp.eq.s32.totalorder %v1644, inf
        %vm1685 = vmand %vm1683, %vm1684
        %v1686 = vsel %vm1685, %v1682, %v1680
        %v1687 = vand.u32 2147483647, %v1686
        %v1688 = vand.u32 %v1607, 2147483648
        %v1689 = vor.u32 %v1687, %v1688
        %v1690 = vand.u32 2147483647, %v1641
        %v1691 = vand.u32 2147483647, %v1608
        %v1692 = vmin.f32 %v1690, %v1691
        %v1693 = vmax.f32 %v1690, %v1691
        %v1694 = vrcp.pop %v1693
        %v1695 = vmul.f32 %v1692, %v1694
        %v1696 = vmul.f32 %v1695, %v1695
        %v1697 = vmul.f32 0.002785687, %v1696
        %v1698 = vadd.f32 %v1697, -0.015866
        %v1699 = vmul.f32 %v1698, %v1696
        %v1700 = vadd.f32 %v1699, 0.04247222
        %v1701 = vmul.f32 %v1700, %v1696
        %v1702 = vadd.f32 %v1701, -0.074975304
        %v1703 = vmul.f32 %v1702, %v1696
        %v1704 = vadd.f32 %v1703, 0.1064488
        %v1705 = vmul.f32 %v1704, %v1696
        %v1706 = vadd.f32 %v1705, -0.14207031
        %v1707 = vmul.f32 %v1706, %v1696
        %v1708 = vadd.f32 %v1707, 0.19993454
        %v1709 = vmul.f32 %v1708, %v1696
        %v1710 = vadd.f32 %v1709, -0.33333147
        %v1711 = vmul.f32 %v1710, %v1696
        %v1712 = vmul.f32 %v1711, %v1695
        %v1713 = vadd.f32 %v1712, %v1695
        %vm1714 = vcmp.gt.f32.partialorder %v1691, %v1690
        %v1715 = vsub.f32 1.5707964, %v1713
        %v1716 = vsel %vm1714, %v1715, %v1713
        %vm1717 = vcmp.lt.f32.partialorder %v1641, 0.0
        %v1718 = vsub.f32 3.1415927, %v1716
        %v1719 = vsel %vm1717, %v1718, %v1716
        %vm1720 = vcmp.lt.s32.totalorder %v1641, 0
        %v1721 = vsel %vm1720, 3.1415927, 0.0
        %vm1722 = vcmp.eq.f32.partialorder %v1608, 0.0
        %v1723 = vsel %vm1722, %v1721, %v1719
        %vm1724 = vcmp.ne.f32.partialorder %v1641, %v1641
        %vm1725 = vcmp.ne.f32.partialorder %v1608, %v1608
        %vm1726 = vmor %vm1724, %vm1725
        %v1727 = vsel %vm1726, nan, %v1723
        %vm1728 = vcmp.lt.f32.partialorder %v1641, 0.0
        %v1729 = vsel %vm1728, 2.3561945, 0.7853982
        %vm1730 = vcmp.eq.s32.totalorder %v1690, inf
        %vm1731 = vcmp.eq.s32.totalorder %v1691, inf
        %vm1732 = vmand %vm1730, %vm1731
        %v1733 = vsel %vm1732, %v1729, %v1727
        %v1734 = vand.u32 2147483647, %v1733
        %v1735 = vand.u32 %v1608, 2147483648
        %v1736 = vor.u32 %v1734, %v1735
        %v1737 = vand.u32 2147483647, %v1642
        %v1738 = vand.u32 2147483647, %v1609
        %v1739 = vmin.f32 %v1737, %v1738
        %v1740 = vmax.f32 %v1737, %v1738
        %v1741 = vrcp.pop %v1740
        %v1742 = vmul.f32 %v1739, %v1741
        %v1743 = vmul.f32 %v1742, %v1742
        %v1744 = vmul.f32 0.002785687, %v1743
        %v1745 = vadd.f32 %v1744, -0.015866
        %v1746 = vmul.f32 %v1745, %v1743
        %v1747 = vadd.f32 %v1746, 0.04247222
        %v1748 = vmul.f32 %v1747, %v1743
        %v1749 = vadd.f32 %v1748, -0.074975304
        %v1750 = vmul.f32 %v1749, %v1743
        %v1751 = vadd.f32 %v1750, 0.1064488
        %v1752 = vmul.f32 %v1751, %v1743
        %v1753 = vadd.f32 %v1752, -0.14207031
        %v1754 = vmul.f32 %v1753, %v1743
        %v1755 = vadd.f32 %v1754, 0.19993454
        %v1756 = vmul.f32 %v1755, %v1743
        %v1757 = vadd.f32 %v1756, -0.33333147
        %v1758 = vmul.f32 %v1757, %v1743
        %v1759 = vmul.f32 %v1758, %v1742
        %v1760 = vadd.f32 %v1759, %v1742
        %vm1761 = vcmp.gt.f32.partialorder %v1738, %v1737
        %v1762 = vsub.f32 1.5707964, %v1760
        %v1763 = vsel %vm1761, %v1762, %v1760
        %vm1764 = vcmp.lt.f32.partialorder %v1642, 0.0
        %v1765 = vsub.f32 3.1415927, %v1763
        %v1766 = vsel %vm1764, %v1765, %v1763
        %vm1767 = vcmp.lt.s32.totalorder %v1642, 0
        %v1768 = vsel %vm1767, 3.1415927, 0.0
        %vm1769 = vcmp.eq.f32.partialorder %v1609, 0.0
        %v1770 = vsel %vm1769, %v1768, %v1766
        %vm1771 = vcmp.ne.f32.partialorder %v1642, %v1642
        %vm1772 = vcmp.ne.f32.partialorder %v1609, %v1609
        %vm1773 = vmor %vm1771, %vm1772
        %v1774 = vsel %vm1773, nan, %v1770
        %vm1775 = vcmp.lt.f32.partialorder %v1642, 0.0
        %v1776 = vsel %vm1775, 2.3561945, 0.7853982
        %vm1777 = vcmp.eq.s32.totalorder %v1737, inf
        %vm1778 = vcmp.eq.s32.totalorder %v1738, inf
        %vm1779 = vmand %vm1777, %vm1778
        %v1780 = vsel %vm1779, %v1776, %v1774
        %v1781 = vand.u32 2147483647, %v1780
        %v1782 = vand.u32 %v1609, 2147483648
        %v1783 = vor.u32 %v1781, %v1782
        %v1784 = vadd.f32 %v1625, 0.001
        %v1785 = vadd.f32 %v1632, 0.001
        %v1786 = vadd.f32 %v1639, 0.001
        %v1787 = vrcp.pop %v1784
        %v1788 = vrcp.pop %v1785
        %v1789 = vrcp.pop %v1786
        %v1790 = vsub.f32 0.0, %v1689
        %v1791 = vsub.f32 0.0, %v1736
        %v1792 = vsub.f32 0.0, %v1783
        %v1793 = vmul.f32 %v1790, %v1592
        %v1794 = vmul.f32 %v1791, %v1598
        %v1795 = vmul.f32 %v1792, %v1604
        %v1796 = vmul.f32 %v1793, %v1787
        %v1797 = vmul.f32 %v1794, %v1788
        %v1798 = vmul.f32 %v1795, %v1789
        %1799 = vst [vmem:[%s198] sm:$0xff] %v1796
        %1800 = vst [vmem:[%s198 + $0x8] sm:$0xff] %v1797
        %1801 = vst [vmem:[%s198 + $0x10] sm:$0xff] %v1798
        %s1802 = sand.u32 %s94, 1
        %s1803 = scalar_lea.sflag [#allocation4], %s1802
        %s1804 = sand.u32 %s94, 1
        %s1805 = smul.addr %s1804, 24
        %s1806 = scalar_lea.vmem [#allocation7], %s1805
        // Predicated region
        $region37: #{tpu_custom_call.1} parent=27 // pred_check
          %p1807 = pneg %p104
        $region38: #{tpu_custom_call.1} parent=27 // pred_check_branch
          %1809 = sbr.rel (%p1807) target = $region40
        $region39: #{tpu_custom_call.1} parent=27 // pred_region
          %s1810 = smul.u32 3, %s24
          %s1812 = ssub.s32 384, 384
          %1813 = vsyncadd %s1803, %s1812
          %s1814 = sadd.s32 %s25, %s1810
          %s1815 = smul.addr %s1814, 128
          %s1816 = scalar_lea.hbm %s2, %s1815
          %s1817 = sshll.u32 %s1806, 4
          %s1818 = int_to_ptr.vmem [resolvable:$true] %s1817
          %1823 = dma.vmem_to_hbm [thread:$0]  %s1818, 384, %s1816, %s1803, 128, 128, 8
        $region40: #{tpu_custom_call.1} parent=27 // pred_fallthru
          _
      $region28: #{tpu_custom_call.1} parent=5 // pred_fallthru
        _
      %p1824 = scmp.le.s32.totalorder 2, %s15
      // Predicated region
      $region41: #{tpu_custom_call.1} parent=5 // pred_check
        %p1825 = pneg %p1824
      $region42: #{tpu_custom_call.1} parent=5 // pred_check_branch
        %1827 = sbr.rel (%p1825) target = $region44
      $region43: #{tpu_custom_call.1} parent=5 // pred_region
        %s1828 = ssub.s32 %s15, 2
        // Predicated region
        $region45: #{tpu_custom_call.1} parent=43 // pred_check
          %p1829 = pneg %p110
        $region46: #{tpu_custom_call.1} parent=43 // pred_check_branch
          %1831 = sbr.rel (%p1829) target = $region48
        $region47: #{tpu_custom_call.1} parent=43 // pred_region
          %s1832 = sand.u32 %s95, 1
          %s1833 = scalar_lea.sflag [#allocation4], %s1832
          %s1834 = sand.u32 %s95, 1
          %s1835 = smul.addr %s1834, 24
          %s1836 = scalar_lea.vmem [#allocation7], %s1835
          %1837 = dma.done %s1833, 384
        $region48: #{tpu_custom_call.1} parent=43 // pred_fallthru
          _
      $region44: #{tpu_custom_call.1} parent=5 // pred_fallthru
        _
    $region6: #{tpu_custom_call.1} parent=1 // loop_footer
      %s19 = sadd.s32 1, %s15
    $region7: #{tpu_custom_call.1} parent=1 // loop_footer_branch
      %14 = sbr.rel target = $region3
    $region8: #{tpu_custom_call.1} parent=1 // loop_exit
      _
    %1838 = vsyncpa [#allocation3], 1
    %s1839 = scalar_lea.sflag [#allocation3], 1
    %1840 = vsyncpa %s1839, 1
    %1841 = vsyncpa [#allocation6], 1
    %1842 = vsyncpa [#allocation4], 1
    %s1843 = scalar_lea.sflag [#allocation4], 1
    %1844 = vsyncpa %s1843, 1

</llo_original>
